<compile_context>
chip_gen: v7x
topology: tpu7x:2x2x1
jax: 0.10.0
libtpu: 0.0.40
codegen_flags: <defaults>
</compile_context>

<pallas_src>
import functools
from typing import NamedTuple

import jax
import jax.numpy as jnp
import numpy as np
from jax import lax
from jax.experimental import pallas as pl
from jax.experimental.pallas import tpu as pltpu

NUM_SELECTORS = 5
LANES = 128            # TPU lane width; class / hidden / score axes pad to this
TK_MAX = 4096          # max contraction tile (multiple of 512)


def _d_tiling(D):
    """Contraction tile size and padded D (D padded up to a multiple of tk)."""
    if D <= TK_MAX:
        tk = 512 * pl.cdiv(D, 512)
    else:
        tk = TK_MAX
    Dp = tk * pl.cdiv(D, tk)
    return tk, Dp


class PackedParams(NamedTuple):
    wb: jax.Array        # (Dp, Kp) bf16, zero-padded on both axes
    bb: jax.Array        # (1, Kp)  f32, zeros on pad lanes
    inv_norm: jax.Array  # (1, Kp)  f32, 1/(||w||+1e-8); 1.0 on pad lanes
    thr: jax.Array       # (1, NUM_SELECTORS) f32
    w1: jax.Array        # (NUM_SELECTORS, Hp) f32, zero-padded
    b1: jax.Array        # (1, Hp)  f32, zero-padded
    w2: jax.Array        # (Hp, LANES) f32, real score weight in column 0
    b2: jax.Array        # (1, LANES)  f32, real score bias in column 0


def pack_params(params, D):
    """One-time packing of the module parameters (do NOT call per forward)."""
    Wb, bb, thr, W1, b1, W2, b2 = params       # Wb == W_fc.T: (D, K), float32
    K = Wb.shape[1]
    hidden = W1.shape[1]
    _, Dp = _d_tiling(D)
    Kp = LANES * pl.cdiv(K, LANES)
    Hp = LANES * pl.cdiv(hidden, LANES)

    wb_pad = jnp.zeros((Dp, Kp), jnp.bfloat16).at[:D, :K].set(
        Wb.astype(jnp.bfloat16))
    bb_pad = jnp.zeros((1, Kp), jnp.float32).at[:, :K].set(bb)
    # RLGeoM inverse per-class weight norms, computed once from the f32 weights
    w_norms = jnp.sqrt(jnp.sum(Wb * Wb, axis=0, keepdims=True))
    inv_norm = jnp.ones((1, Kp), jnp.float32).at[:, :K].set(
        1.0 / (w_norms + 1e-8))
    w1_pad = jnp.zeros((NUM_SELECTORS, Hp), jnp.float32).at[:, :hidden].set(W1)
    b1_pad = jnp.zeros((1, Hp), jnp.float32).at[:, :hidden].set(b1)
    w2_pad = jnp.zeros((Hp, LANES), jnp.float32).at[:hidden, :1].set(W2)
    b2_pad = jnp.zeros((1, LANES), jnp.float32).at[:, :1].set(b2)
    return PackedParams(wb_pad, bb_pad, inv_norm, thr,
                        w1_pad, b1_pad, w2_pad, b2_pad)


def ensemble_kernel(x_ref, wb_ref, bb_ref, inv_norm_ref, thr_ref,
                    w1_ref, b1_ref, w2_ref, b2_ref,
                    logits_ref, score_ref, *, num_classes):
    k = pl.program_id(0)
    nk = pl.num_programs(0)

    # --- head matmul, accumulated across the D (contraction) grid axis ------
    @pl.when(k == 0)
    def _init():
        logits_ref[...] = jnp.zeros(logits_ref.shape, jnp.float32) + bb_ref[...]

    # x streams as f32; cast to bf16 in VMEM right before the MXU dot.
    logits_ref[...] += jnp.dot(x_ref[...].astype(jnp.bfloat16), wb_ref[...],
                               preferred_element_type=jnp.float32)

    # --- selector / score epilogue, only on the last contraction step -------
    @pl.when(k == nk - 1)
    def _epilogue():
        logits = logits_ref[...]                        # (B, Kp)
        B, Kp = logits.shape
        cls_iota = lax.broadcasted_iota(jnp.int32, (B, Kp), 1)
        valid = cls_iota < num_classes                  # pad-lane mask

        def top1_minus_top2(z):
            # sorted[:,0] - sorted[:,1] (descending) without a sort: mask out
            # exactly one occurrence of the max, take max again (shared iota).
            m1 = jnp.max(z, axis=1, keepdims=True)
            first_idx = jnp.min(jnp.where(z == m1, cls_iota, Kp),
                                axis=1, keepdims=True)
            z2 = jnp.where(cls_iota == first_idx, -jnp.inf, z)
            return m1 - jnp.max(z2, axis=1, keepdims=True)        # (B, 1)

        # softmax over valid classes (pad lanes -> exp(-inf) == 0)
        masked_logits = jnp.where(valid, logits, -jnp.inf)
        m = jnp.max(masked_logits, axis=1, keepdims=True)
        e = jnp.exp(masked_logits - m)
        s = jnp.sum(e, axis=1, keepdims=True)
        probs = e / s                                   # exact (one-shot epilogue)

        sr_max = jnp.max(probs, axis=1, keepdims=True)
        sr_doctor = 1.0 - 1.0 / jnp.sum(probs * probs, axis=1, keepdims=True)
        sr_entropy = jnp.sum(probs * jnp.log(probs + 1e-10), axis=1,
                             keepdims=True)             # == -entropy

        geo = jnp.where(valid, logits * inv_norm_ref[...], -jnp.inf)
        rl_geom = top1_minus_top2(geo)
        rl_confm = top1_minus_top2(masked_logits)

        # No (B,5) stacking: normalize each selector over the (un-gridded)
        # batch and feed it straight into the first Linear as ind_i * W1[i,:].
        hidden_p = b1_ref.shape[1]
        h = jnp.zeros((B, hidden_p), jnp.float32) + b1_ref[...]
        for i, s_i in enumerate((sr_max, sr_doctor, sr_entropy,
                                 rl_geom, rl_confm)):
            mn = jnp.min(s_i, axis=0, keepdims=True)
            mx = jnp.max(s_i, axis=0, keepdims=True)
            denom = mx - mn
            denom = jnp.where(denom == 0.0, 1.0, denom)
            normalized = 2.0 * (s_i - mn) / denom - 1.0
            ind = jnp.tanh(normalized - thr_ref[:, i:i + 1])      # (B, 1)
            h = h + ind * w1_ref[i:i + 1, :]                      # (B, Hp)
        h = jnp.maximum(h, 0.0)

        # Lane-dense (Hp, 128) W2 slab; only column 0 is the real score.
        score_ref[...] = jnp.dot(h, w2_ref[...],
                                 preferred_element_type=jnp.float32) + b2_ref[...]


def ensemble_forward(x, packed, *, num_classes):
    """x: (B, C, H, W), packed: PackedParams -> (logits (B, K), score (B,))."""
    B = x.shape[0]
    D = int(np.prod(x.shape[1:]))
    tk, Dp = _d_tiling(D)
    Kp = packed.wb.shape[1]
    Hp = packed.w1.shape[1]
    assert packed.wb.shape[0] == Dp, "packed params do not match this input"
    nk = Dp // tk

    x_flat = x.reshape(B, D)                 # stays f32; cast happens in-kernel
    if Dp != D:
        # zero-padded reduction tail contributes 0 to the logits accumulator
        x_flat = jnp.pad(x_flat, ((0, 0), (0, Dp - D)))

    if nk >= 3:
        # long reduction loop: keep Wb DMAs back-to-back across step boundaries
        wb_spec = pl.BlockSpec((tk, Kp), lambda k: (k, 0),
                               pipeline_mode=pl.Buffered(3))
    else:
        wb_spec = pl.BlockSpec((tk, Kp), lambda k: (k, 0))

    flops = 2 * B * Dp * Kp + 2 * B * Hp * LANES
    bytes_accessed = int(x_flat.size * 4 + packed.wb.size * 2
                         + B * (Kp + LANES) * 4
                         + (2 * Kp + NUM_SELECTORS
                            + (NUM_SELECTORS + 1) * Hp + (Hp + 1) * LANES) * 4)
    transcendentals = 2 * B * Kp + 5 * B     # exp + log + tanh

    kernel = functools.partial(ensemble_kernel, num_classes=num_classes)

    logits_pad, score_pad = pl.pallas_call(
        kernel,
        out_shape=(jax.ShapeDtypeStruct((B, Kp), jnp.float32),
                   jax.ShapeDtypeStruct((B, LANES), jnp.float32)),
        grid=(nk,),
        in_specs=[
            pl.BlockSpec((B, tk), lambda k: (0, k)),               # x (f32)
            wb_spec,                                               # Wb (bf16)
            pl.BlockSpec((1, Kp), lambda k: (0, 0)),               # bias
            pl.BlockSpec((1, Kp), lambda k: (0, 0)),               # 1/||w||
            pl.BlockSpec((1, NUM_SELECTORS), lambda k: (0, 0)),    # thresholds
            pl.BlockSpec((NUM_SELECTORS, Hp), lambda k: (0, 0)),   # W1
            pl.BlockSpec((1, Hp), lambda k: (0, 0)),               # b1
            pl.BlockSpec((Hp, LANES), lambda k: (0, 0)),           # W2
            pl.BlockSpec((1, LANES), lambda k: (0, 0)),            # b2
        ],
        out_specs=(pl.BlockSpec((B, Kp), lambda k: (0, 0)),        # logits acc
                   pl.BlockSpec((B, LANES), lambda k: (0, 0))),    # score slab
        compiler_params=pltpu.CompilerParams(
            # Single "arbitrary" reduction axis over D; the batch is NOT
            # gridded so the min/max normalization stays batch-global.
            dimension_semantics=("arbitrary",)),
        cost_estimate=pl.CostEstimate(flops=flops,
                                      transcendentals=transcendentals,
                                      bytes_accessed=bytes_accessed),
    )(x_flat, packed.wb, packed.bb, packed.inv_norm, packed.thr,
      packed.w1, packed.b1, packed.w2, packed.b2)

    return logits_pad[:, :num_classes], score_pad[:, 0]


def init_params(key, D, K, hidden=32):
    k1, k2, k3 = jax.random.split(key, 3)
    # base model head weight (stored transposed: (D, K) == W_fc.T), zero bias
    Wb = jax.random.normal(k1, (D, K), jnp.float32) * 0.02
    bb = jnp.zeros((1, K), jnp.float32)
    # learnable thresholds init to zeros (as in the module)
    thr = jnp.zeros((1, NUM_SELECTORS), jnp.float32)
    # xavier-uniform for score_network linears, zero biases
    lim1 = float(np.sqrt(6.0 / (NUM_SELECTORS + hidden)))
    W1 = jax.random.uniform(k2, (NUM_SELECTORS, hidden), jnp.float32, -lim1, lim1)
    b1 = jnp.zeros((1, hidden), jnp.float32)
    lim2 = float(np.sqrt(6.0 / (hidden + 1)))
    W2 = jax.random.uniform(k3, (hidden, 1), jnp.float32, -lim2, lim2)
    b2 = jnp.zeros((1, 1), jnp.float32)
    return Wb, bb, thr, W1, b1, W2, b2


def reference_forward(x, params):
    """Pure-JAX mirror of the PyTorch forward (sort-based top-2).

    Uses the same bf16 operands for the head matmul (f32 accumulation) as the
    kernel; everything else is exact f32.
    """
    Wb, bb, thr, W1, b1, W2, b2 = params
    B = x.shape[0]
    x_flat = x.reshape(B, -1).astype(jnp.bfloat16)
    logits = jnp.dot(x_flat, Wb.astype(jnp.bfloat16),
                     preferred_element_type=jnp.float32) + bb

    probs = jax.nn.softmax(logits, axis=1)
    sr_max = probs.max(axis=1)
    sr_doctor = 1.0 - 1.0 / jnp.sum(probs ** 2, axis=1)
    sr_entropy = jnp.sum(probs * jnp.log(probs + 1e-10), axis=1)

    w_norms = jnp.sqrt(jnp.sum(Wb ** 2, axis=0))     # == torch.norm(W_fc, dim=1)
    geo = logits / (w_norms + 1e-8)[None, :]

    def t12(z):
        sz = jnp.sort(z, axis=1)[:, ::-1]
        return sz[:, 0] - sz[:, 1]

    scores = jnp.stack([sr_max, sr_doctor, sr_entropy, t12(geo), t12(logits)],
                       axis=1)
    min_v = scores.min(axis=0, keepdims=True)
    max_v = scores.max(axis=0, keepdims=True)
    denom = jnp.where(max_v - min_v == 0.0, 1.0, max_v - min_v)
    normalized = 2.0 * (scores - min_v) / denom - 1.0
    indicators = jnp.tanh(normalized - thr)
    h = jnp.maximum(indicators @ W1 + b1, 0.0)
    score = (h @ W2 + b2)[:, 0]
    return logits, score


if __name__ == "__main__":
    B, C, H, W = 8, 4, 16, 16          # x: NCHW
    K = 10                             # num classes
    HIDDEN = 32
    D = C * H * W

    key = jax.random.PRNGKey(0)
    kx, kp = jax.random.split(key)
    x = jax.random.normal(kx, (B, C, H, W), jnp.float32)
    params = init_params(kp, D, K, HIDDEN)

    # One-time parameter packing (amortized across calls), then the jitted
    # forward only reshapes x and launches the kernel.
    packed = jax.tree_util.tree_map(jax.block_until_ready, pack_params(params, D))
    fwd = jax.jit(ensemble_forward, static_argnames=("num_classes",))

    logits, score = fwd(x, packed, num_classes=K)
    jax.block_until_ready((logits, score))

    ref_logits, ref_score = reference_forward(x, params)
    assert logits.shape == (B, K) and score.shape == (B,)
    np.testing.assert_allclose(np.asarray(logits), np.asarray(ref_logits),
                               rtol=1e-4, atol=1e-4)
    # Exact division restored in the epilogue (approx reciprocals removed),
    # so the score matches the reference to a tight tolerance; the remaining
    # slack covers f32 op-ordering differences amplified by the batch min/max
    # normalization.
    np.testing.assert_allclose(np.asarray(score), np.asarray(ref_score),
                               rtol=2e-3, atol=2e-3)
    print("KERNEL_OK")
</pallas_src>

<mosaic_0001>
module attributes {stable_mosaic.version = 11 : i64} {
  func.func @ensemble_kernel(%arg0: i32, %arg1: memref<8x1024xf32, #tpu.memory_space<vmem>>, %arg2: memref<1024x128xbf16, #tpu.memory_space<vmem>>, %arg3: memref<1x128xf32, #tpu.memory_space<vmem>>, %arg4: memref<1x128xf32, #tpu.memory_space<vmem>>, %arg5: memref<1x5xf32, #tpu.memory_space<vmem>>, %arg6: memref<5x128xf32, #tpu.memory_space<vmem>>, %arg7: memref<1x128xf32, #tpu.memory_space<vmem>>, %arg8: memref<128x128xf32, #tpu.memory_space<vmem>>, %arg9: memref<1x128xf32, #tpu.memory_space<vmem>>, %arg10: memref<8x128xf32, #tpu.memory_space<vmem>>, %arg11: memref<8x128xf32, #tpu.memory_space<vmem>>) attributes {dimension_semantics = [#tpu.dimension_semantics<arbitrary>], iteration_bounds = array<i64: 1>, scalar_prefetch = 0 : i64, scratch_operands = 0 : i64, tpu.core_type = #tpu.core_type<tc>, window_params = [{transform_indices = @transform_0, window_bounds = array<i64: 8, 1024>}, {transform_indices = @transform_1, window_bounds = array<i64: 1024, 128>}, {pipeline_mode = #tpu.pipeline_mode<synchronous>, transform_indices = @transform_2, window_bounds = array<i64: 1, 128>}, {pipeline_mode = #tpu.pipeline_mode<synchronous>, transform_indices = @transform_3, window_bounds = array<i64: 1, 128>}, {pipeline_mode = #tpu.pipeline_mode<synchronous>, transform_indices = @transform_4, window_bounds = array<i64: 1, 5>}, {pipeline_mode = #tpu.pipeline_mode<synchronous>, transform_indices = @transform_5, window_bounds = array<i64: 5, 128>}, {pipeline_mode = #tpu.pipeline_mode<synchronous>, transform_indices = @transform_6, window_bounds = array<i64: 1, 128>}, {pipeline_mode = #tpu.pipeline_mode<synchronous>, transform_indices = @transform_7, window_bounds = array<i64: 128, 128>}, {pipeline_mode = #tpu.pipeline_mode<synchronous>, transform_indices = @transform_8, window_bounds = array<i64: 1, 128>}, {pipeline_mode = #tpu.pipeline_mode<synchronous>, transform_indices = @transform_9, window_bounds = array<i64: 8, 128>}, {pipeline_mode = #tpu.pipeline_mode<synchronous>, transform_indices = @transform_10, window_bounds = array<i64: 8, 128>}]} {
    %c0_i32 = arith.constant 0 : i32
    %0 = arith.cmpi eq, %arg0, %c0_i32 : i32
    %1 = arith.extui %0 : i1 to i32
    %c0_i32_0 = arith.constant 0 : i32
    %2 = arith.cmpi ne, %1, %c0_i32_0 : i32
    scf.if %2 {
      %cst_10 = arith.constant 0.000000e+00 : f32
      %13 = vector.broadcast %cst_10 : f32 to vector<8x128xf32>
      %c0_11 = arith.constant 0 : index
      %c0_12 = arith.constant 0 : index
      %14 = vector.load %arg3[%c0_11, %c0_12] : memref<1x128xf32, #tpu.memory_space<vmem>>, vector<1x128xf32>
      %15 = vector.broadcast %14 : vector<1x128xf32> to vector<8x128xf32>
      %16 = arith.addf %13, %15 : vector<8x128xf32>
      %c0_13 = arith.constant 0 : index
      %c0_14 = arith.constant 0 : index
      %17 = vector.load %arg10[%c0_13, %c0_14] : memref<8x128xf32, #tpu.memory_space<vmem>>, vector<8x128xf32>
      tpu.vector_store %arg10[%c0_13, %c0_14], %16 {strides = array<i32>} : memref<8x128xf32, #tpu.memory_space<vmem>>, vector<8x128xf32>,
    } else {
    }
    %c0 = arith.constant 0 : index
    %c0_1 = arith.constant 0 : index
    %3 = vector.load %arg10[%c0, %c0_1] : memref<8x128xf32, #tpu.memory_space<vmem>>, vector<8x128xf32>
    %c0_2 = arith.constant 0 : index
    %c0_3 = arith.constant 0 : index
    %4 = vector.load %arg1[%c0_2, %c0_3] : memref<8x1024xf32, #tpu.memory_space<vmem>>, vector<8x1024xf32>
    %5 = arith.truncf %4 : vector<8x1024xf32> to vector<8x1024xbf16>
    %c0_4 = arith.constant 0 : index
    %c0_5 = arith.constant 0 : index
    %6 = vector.load %arg2[%c0_4, %c0_5] : memref<1024x128xbf16, #tpu.memory_space<vmem>>, vector<1024x128xbf16>
    %cst = arith.constant dense<0.000000e+00> : vector<8x128xf32>
    %7 = tpu.matmul %5, %6, %cst {dimension_numbers = #tpu.dot_dimension_numbers<[1], [0], [0], [1], [0, 0, 1, 1], [], []>} : vector<8x1024xbf16>, vector<1024x128xbf16>, vector<8x128xf32> -> vector<8x128xf32>
    %8 = arith.addf %3, %7 : vector<8x128xf32>
    %c0_6 = arith.constant 0 : index
    %c0_7 = arith.constant 0 : index
    %9 = vector.load %arg10[%c0_6, %c0_7] : memref<8x128xf32, #tpu.memory_space<vmem>>, vector<8x128xf32>
    tpu.vector_store %arg10[%c0_6, %c0_7], %8 {strides = array<i32>} : memref<8x128xf32, #tpu.memory_space<vmem>>, vector<8x128xf32>,
    %c0_i32_8 = arith.constant 0 : i32
    %10 = arith.cmpi eq, %arg0, %c0_i32_8 : i32
    %11 = arith.extui %10 : i1 to i32
    %c0_i32_9 = arith.constant 0 : i32
    %12 = arith.cmpi ne, %11, %c0_i32_9 : i32
    scf.if %12 {
      %c0_10 = arith.constant 0 : index
      %c0_11 = arith.constant 0 : index
      %13 = vector.load %arg10[%c0_10, %c0_11] : memref<8x128xf32, #tpu.memory_space<vmem>>, vector<8x128xf32>
      %14 = tpu.iota {dimensions = array<i32: 1>} : vector<8x128xi32>
      %c10_i32 = arith.constant 10 : i32
      %15 = vector.broadcast %c10_i32 : i32 to vector<8x128xi32>
      %16 = arith.cmpi slt, %14, %15 : vector<8x128xi32>
      %cst_12 = arith.constant 0xFF800000 : f32
      %17 = vector.broadcast %cst_12 : f32 to vector<8x128xf32>
      %18 = arith.select %16, %13, %17 : vector<8x128xi1>, vector<8x128xf32>
      %cst_13 = arith.constant dense<0xFF800000> : vector<8xf32>
      %19 = vector.multi_reduction <maximumf>, %18, %cst_13 [1] : vector<8x128xf32> to vector<8xf32>
      %20 = vector.shape_cast %19 : vector<8xf32> to vector<8x1xf32>
      %21 = vector.broadcast %20 : vector<8x1xf32> to vector<8x128xf32>
      %22 = arith.subf %18, %21 : vector<8x128xf32>
      %23 = math.exp %22 : vector<8x128xf32>
      %cst_14 = arith.constant dense<0.000000e+00> : vector<8xf32>
      %24 = vector.multi_reduction <add>, %23, %cst_14 [1] : vector<8x128xf32> to vector<8xf32>
      %25 = vector.shape_cast %24 : vector<8xf32> to vector<8x1xf32>
      %26 = vector.broadcast %25 : vector<8x1xf32> to vector<8x128xf32>
      %27 = arith.divf %23, %26 : vector<8x128xf32>
      %cst_15 = arith.constant dense<0xFF800000> : vector<8xf32>
      %28 = vector.multi_reduction <maximumf>, %27, %cst_15 [1] : vector<8x128xf32> to vector<8xf32>
      %29 = vector.shape_cast %28 : vector<8xf32> to vector<8x1xf32>
      %30 = arith.mulf %27, %27 : vector<8x128xf32>
      %cst_16 = arith.constant dense<0.000000e+00> : vector<8xf32>
      %31 = vector.multi_reduction <add>, %30, %cst_16 [1] : vector<8x128xf32> to vector<8xf32>
      %32 = vector.shape_cast %31 : vector<8xf32> to vector<8x1xf32>
      %cst_17 = arith.constant 1.000000e+00 : f32
      %33 = vector.broadcast %cst_17 : f32 to vector<8x1xf32>
      %34 = arith.divf %33, %32 : vector<8x1xf32>
      %cst_18 = arith.constant 1.000000e+00 : f32
      %35 = vector.broadcast %cst_18 : f32 to vector<8x1xf32>
      %36 = arith.subf %35, %34 : vector<8x1xf32>
      %cst_19 = arith.constant 1.000000e-10 : f32
      %37 = vector.broadcast %cst_19 : f32 to vector<8x128xf32>
      %38 = arith.addf %27, %37 : vector<8x128xf32>
      %39 = math.log %38 : vector<8x128xf32>
      %40 = arith.mulf %27, %39 : vector<8x128xf32>
      %cst_20 = arith.constant dense<0.000000e+00> : vector<8xf32>
      %41 = vector.multi_reduction <add>, %40, %cst_20 [1] : vector<8x128xf32> to vector<8xf32>
      %42 = vector.shape_cast %41 : vector<8xf32> to vector<8x1xf32>
      %c0_21 = arith.constant 0 : index
      %c0_22 = arith.constant 0 : index
      %43 = vector.load %arg4[%c0_21, %c0_22] : memref<1x128xf32, #tpu.memory_space<vmem>>, vector<1x128xf32>
      %44 = vector.broadcast %43 : vector<1x128xf32> to vector<8x128xf32>
      %45 = arith.mulf %13, %44 : vector<8x128xf32>
      %cst_23 = arith.constant 0xFF800000 : f32
      %46 = vector.broadcast %cst_23 : f32 to vector<8x128xf32>
      %47 = arith.select %16, %45, %46 : vector<8x128xi1>, vector<8x128xf32>
      %cst_24 = arith.constant dense<0xFF800000> : vector<8xf32>
      %48 = vector.multi_reduction <maximumf>, %47, %cst_24 [1] : vector<8x128xf32> to vector<8xf32>
      %49 = vector.shape_cast %48 : vector<8xf32> to vector<8x1xf32>
      %50 = vector.broadcast %49 : vector<8x1xf32> to vector<8x128xf32>
      %51 = arith.cmpf oeq, %47, %50 : vector<8x128xf32>
      %c128_i32 = arith.constant 128 : i32
      %52 = vector.broadcast %c128_i32 : i32 to vector<8x128xi32>
      %53 = arith.select %51, %14, %52 : vector<8x128xi1>, vector<8x128xi32>
      %cst_25 = arith.constant dense<2147483647> : vector<8xi32>
      %54 = vector.multi_reduction <minsi>, %53, %cst_25 [1] : vector<8x128xi32> to vector<8xi32>
      %55 = vector.shape_cast %54 : vector<8xi32> to vector<8x1xi32>
      %56 = vector.broadcast %55 : vector<8x1xi32> to vector<8x128xi32>
      %57 = arith.cmpi eq, %14, %56 : vector<8x128xi32>
      %cst_26 = arith.constant 0xFF800000 : f32
      %58 = vector.broadcast %cst_26 : f32 to vector<8x128xf32>
      %59 = arith.select %57, %58, %47 : vector<8x128xi1>, vector<8x128xf32>
      %cst_27 = arith.constant dense<0xFF800000> : vector<8xf32>
      %60 = vector.multi_reduction <maximumf>, %59, %cst_27 [1] : vector<8x128xf32> to vector<8xf32>
      %61 = vector.shape_cast %60 : vector<8xf32> to vector<8x1xf32>
      %62 = arith.subf %49, %61 : vector<8x1xf32>
      %cst_28 = arith.constant dense<0xFF800000> : vector<8xf32>
      %63 = vector.multi_reduction <maximumf>, %18, %cst_28 [1] : vector<8x128xf32> to vector<8xf32>
      %64 = vector.shape_cast %63 : vector<8xf32> to vector<8x1xf32>
      %65 = vector.broadcast %64 : vector<8x1xf32> to vector<8x128xf32>
      %66 = arith.cmpf oeq, %18, %65 : vector<8x128xf32>
      %c128_i32_29 = arith.constant 128 : i32
      %67 = vector.broadcast %c128_i32_29 : i32 to vector<8x128xi32>
      %68 = arith.select %66, %14, %67 : vector<8x128xi1>, vector<8x128xi32>
      %cst_30 = arith.constant dense<2147483647> : vector<8xi32>
      %69 = vector.multi_reduction <minsi>, %68, %cst_30 [1] : vector<8x128xi32> to vector<8xi32>
      %70 = vector.shape_cast %69 : vector<8xi32> to vector<8x1xi32>
      %71 = vector.broadcast %70 : vector<8x1xi32> to vector<8x128xi32>
      %72 = arith.cmpi eq, %14, %71 : vector<8x128xi32>
      %cst_31 = arith.constant 0xFF800000 : f32
      %73 = vector.broadcast %cst_31 : f32 to vector<8x128xf32>
      %74 = arith.select %72, %73, %18 : vector<8x128xi1>, vector<8x128xf32>
      %cst_32 = arith.constant dense<0xFF800000> : vector<8xf32>
      %75 = vector.multi_reduction <maximumf>, %74, %cst_32 [1] : vector<8x128xf32> to vector<8xf32>
      %76 = vector.shape_cast %75 : vector<8xf32> to vector<8x1xf32>
      %77 = arith.subf %64, %76 : vector<8x1xf32>
      %cst_33 = arith.constant 0.000000e+00 : f32
      %78 = vector.broadcast %cst_33 : f32 to vector<8x128xf32>
      %c0_34 = arith.constant 0 : index
      %c0_35 = arith.constant 0 : index
      %79 = vector.load %arg7[%c0_34, %c0_35] : memref<1x128xf32, #tpu.memory_space<vmem>>, vector<1x128xf32>
      %80 = vector.broadcast %79 : vector<1x128xf32> to vector<8x128xf32>
      %81 = arith.addf %78, %80 : vector<8x128xf32>
      %cst_36 = arith.constant dense<0x7F800000> : vector<1xf32>
      %82 = vector.multi_reduction <minimumf>, %29, %cst_36 [0] : vector<8x1xf32> to vector<1xf32>
      %83 = vector.shape_cast %82 : vector<1xf32> to vector<1x1xf32>
      %cst_37 = arith.constant dense<0xFF800000> : vector<1xf32>
      %84 = vector.multi_reduction <maximumf>, %29, %cst_37 [0] : vector<8x1xf32> to vector<1xf32>
      %85 = vector.shape_cast %84 : vector<1xf32> to vector<1x1xf32>
      %86 = arith.subf %85, %83 : vector<1x1xf32>
      %cst_38 = arith.constant 0.000000e+00 : f32
      %87 = vector.broadcast %cst_38 : f32 to vector<1x1xf32>
      %88 = arith.cmpf oeq, %86, %87 : vector<1x1xf32>
      %cst_39 = arith.constant 1.000000e+00 : f32
      %89 = vector.broadcast %cst_39 : f32 to vector<1x1xf32>
      %90 = arith.select %88, %89, %86 : vector<1x1xi1>, vector<1x1xf32>
      %91 = vector.broadcast %83 : vector<1x1xf32> to vector<8x1xf32>
      %92 = arith.subf %29, %91 : vector<8x1xf32>
      %cst_40 = arith.constant 2.000000e+00 : f32
      %93 = vector.broadcast %cst_40 : f32 to vector<8x1xf32>
      %94 = arith.mulf %93, %92 : vector<8x1xf32>
      %95 = vector.broadcast %90 : vector<1x1xf32> to vector<8x1xf32>
      %96 = arith.divf %94, %95 : vector<8x1xf32>
      %cst_41 = arith.constant 1.000000e+00 : f32
      %97 = vector.broadcast %cst_41 : f32 to vector<8x1xf32>
      %98 = arith.subf %96, %97 : vector<8x1xf32>
      %c0_42 = arith.constant 0 : index
      %c0_43 = arith.constant 0 : index
      %99 = vector.load %arg5[%c0_42, %c0_43] : memref<1x5xf32, #tpu.memory_space<vmem>>, vector<1x1xf32>
      %100 = vector.broadcast %99 : vector<1x1xf32> to vector<8x1xf32>
      %101 = arith.subf %98, %100 : vector<8x1xf32>
      %102 = math.tanh %101 : vector<8x1xf32>
      %c0_44 = arith.constant 0 : index
      %c0_45 = arith.constant 0 : index
      %103 = vector.load %arg6[%c0_44, %c0_45] : memref<5x128xf32, #tpu.memory_space<vmem>>, vector<1x128xf32>
      %104 = vector.broadcast %102 : vector<8x1xf32> to vector<8x128xf32>
      %105 = vector.broadcast %103 : vector<1x128xf32> to vector<8x128xf32>
      %106 = arith.mulf %104, %105 : vector<8x128xf32>
      %107 = arith.addf %81, %106 : vector<8x128xf32>
      %cst_46 = arith.constant dense<0x7F800000> : vector<1xf32>
      %108 = vector.multi_reduction <minimumf>, %36, %cst_46 [0] : vector<8x1xf32> to vector<1xf32>
      %109 = vector.shape_cast %108 : vector<1xf32> to vector<1x1xf32>
      %cst_47 = arith.constant dense<0xFF800000> : vector<1xf32>
      %110 = vector.multi_reduction <maximumf>, %36, %cst_47 [0] : vector<8x1xf32> to vector<1xf32>
      %111 = vector.shape_cast %110 : vector<1xf32> to vector<1x1xf32>
      %112 = arith.subf %111, %109 : vector<1x1xf32>
      %cst_48 = arith.constant 0.000000e+00 : f32
      %113 = vector.broadcast %cst_48 : f32 to vector<1x1xf32>
      %114 = arith.cmpf oeq, %112, %113 : vector<1x1xf32>
      %cst_49 = arith.constant 1.000000e+00 : f32
      %115 = vector.broadcast %cst_49 : f32 to vector<1x1xf32>
      %116 = arith.select %114, %115, %112 : vector<1x1xi1>, vector<1x1xf32>
      %117 = vector.broadcast %109 : vector<1x1xf32> to vector<8x1xf32>
      %118 = arith.subf %36, %117 : vector<8x1xf32>
      %cst_50 = arith.constant 2.000000e+00 : f32
      %119 = vector.broadcast %cst_50 : f32 to vector<8x1xf32>
      %120 = arith.mulf %119, %118 : vector<8x1xf32>
      %121 = vector.broadcast %116 : vector<1x1xf32> to vector<8x1xf32>
      %122 = arith.divf %120, %121 : vector<8x1xf32>
      %cst_51 = arith.constant 1.000000e+00 : f32
      %123 = vector.broadcast %cst_51 : f32 to vector<8x1xf32>
      %124 = arith.subf %122, %123 : vector<8x1xf32>
      %c0_52 = arith.constant 0 : index
      %c1 = arith.constant 1 : index
      %125 = vector.load %arg5[%c0_52, %c1] : memref<1x5xf32, #tpu.memory_space<vmem>>, vector<1x1xf32>
      %126 = vector.broadcast %125 : vector<1x1xf32> to vector<8x1xf32>
      %127 = arith.subf %124, %126 : vector<8x1xf32>
      %128 = math.tanh %127 : vector<8x1xf32>
      %c1_53 = arith.constant 1 : index
      %c0_54 = arith.constant 0 : index
      %129 = vector.load %arg6[%c1_53, %c0_54] : memref<5x128xf32, #tpu.memory_space<vmem>>, vector<1x128xf32>
      %130 = vector.broadcast %128 : vector<8x1xf32> to vector<8x128xf32>
      %131 = vector.broadcast %129 : vector<1x128xf32> to vector<8x128xf32>
      %132 = arith.mulf %130, %131 : vector<8x128xf32>
      %133 = arith.addf %107, %132 : vector<8x128xf32>
      %cst_55 = arith.constant dense<0x7F800000> : vector<1xf32>
      %134 = vector.multi_reduction <minimumf>, %42, %cst_55 [0] : vector<8x1xf32> to vector<1xf32>
      %135 = vector.shape_cast %134 : vector<1xf32> to vector<1x1xf32>
      %cst_56 = arith.constant dense<0xFF800000> : vector<1xf32>
      %136 = vector.multi_reduction <maximumf>, %42, %cst_56 [0] : vector<8x1xf32> to vector<1xf32>
      %137 = vector.shape_cast %136 : vector<1xf32> to vector<1x1xf32>
      %138 = arith.subf %137, %135 : vector<1x1xf32>
      %cst_57 = arith.constant 0.000000e+00 : f32
      %139 = vector.broadcast %cst_57 : f32 to vector<1x1xf32>
      %140 = arith.cmpf oeq, %138, %139 : vector<1x1xf32>
      %cst_58 = arith.constant 1.000000e+00 : f32
      %141 = vector.broadcast %cst_58 : f32 to vector<1x1xf32>
      %142 = arith.select %140, %141, %138 : vector<1x1xi1>, vector<1x1xf32>
      %143 = vector.broadcast %135 : vector<1x1xf32> to vector<8x1xf32>
      %144 = arith.subf %42, %143 : vector<8x1xf32>
      %cst_59 = arith.constant 2.000000e+00 : f32
      %145 = vector.broadcast %cst_59 : f32 to vector<8x1xf32>
      %146 = arith.mulf %145, %144 : vector<8x1xf32>
      %147 = vector.broadcast %142 : vector<1x1xf32> to vector<8x1xf32>
      %148 = arith.divf %146, %147 : vector<8x1xf32>
      %cst_60 = arith.constant 1.000000e+00 : f32
      %149 = vector.broadcast %cst_60 : f32 to vector<8x1xf32>
      %150 = arith.subf %148, %149 : vector<8x1xf32>
      %c0_61 = arith.constant 0 : index
      %c2 = arith.constant 2 : index
      %151 = vector.load %arg5[%c0_61, %c2] : memref<1x5xf32, #tpu.memory_space<vmem>>, vector<1x1xf32>
      %152 = vector.broadcast %151 : vector<1x1xf32> to vector<8x1xf32>
      %153 = arith.subf %150, %152 : vector<8x1xf32>
      %154 = math.tanh %153 : vector<8x1xf32>
      %c2_62 = arith.constant 2 : index
      %c0_63 = arith.constant 0 : index
      %155 = vector.load %arg6[%c2_62, %c0_63] : memref<5x128xf32, #tpu.memory_space<vmem>>, vector<1x128xf32>
      %156 = vector.broadcast %154 : vector<8x1xf32> to vector<8x128xf32>
      %157 = vector.broadcast %155 : vector<1x128xf32> to vector<8x128xf32>
      %158 = arith.mulf %156, %157 : vector<8x128xf32>
      %159 = arith.addf %133, %158 : vector<8x128xf32>
      %cst_64 = arith.constant dense<0x7F800000> : vector<1xf32>
      %160 = vector.multi_reduction <minimumf>, %62, %cst_64 [0] : vector<8x1xf32> to vector<1xf32>
      %161 = vector.shape_cast %160 : vector<1xf32> to vector<1x1xf32>
      %cst_65 = arith.constant dense<0xFF800000> : vector<1xf32>
      %162 = vector.multi_reduction <maximumf>, %62, %cst_65 [0] : vector<8x1xf32> to vector<1xf32>
      %163 = vector.shape_cast %162 : vector<1xf32> to vector<1x1xf32>
      %164 = arith.subf %163, %161 : vector<1x1xf32>
      %cst_66 = arith.constant 0.000000e+00 : f32
      %165 = vector.broadcast %cst_66 : f32 to vector<1x1xf32>
      %166 = arith.cmpf oeq, %164, %165 : vector<1x1xf32>
      %cst_67 = arith.constant 1.000000e+00 : f32
      %167 = vector.broadcast %cst_67 : f32 to vector<1x1xf32>
      %168 = arith.select %166, %167, %164 : vector<1x1xi1>, vector<1x1xf32>
      %169 = vector.broadcast %161 : vector<1x1xf32> to vector<8x1xf32>
      %170 = arith.subf %62, %169 : vector<8x1xf32>
      %cst_68 = arith.constant 2.000000e+00 : f32
      %171 = vector.broadcast %cst_68 : f32 to vector<8x1xf32>
      %172 = arith.mulf %171, %170 : vector<8x1xf32>
      %173 = vector.broadcast %168 : vector<1x1xf32> to vector<8x1xf32>
      %174 = arith.divf %172, %173 : vector<8x1xf32>
      %cst_69 = arith.constant 1.000000e+00 : f32
      %175 = vector.broadcast %cst_69 : f32 to vector<8x1xf32>
      %176 = arith.subf %174, %175 : vector<8x1xf32>
      %c0_70 = arith.constant 0 : index
      %c3 = arith.constant 3 : index
      %177 = vector.load %arg5[%c0_70, %c3] : memref<1x5xf32, #tpu.memory_space<vmem>>, vector<1x1xf32>
      %178 = vector.broadcast %177 : vector<1x1xf32> to vector<8x1xf32>
      %179 = arith.subf %176, %178 : vector<8x1xf32>
      %180 = math.tanh %179 : vector<8x1xf32>
      %c3_71 = arith.constant 3 : index
      %c0_72 = arith.constant 0 : index
      %181 = vector.load %arg6[%c3_71, %c0_72] : memref<5x128xf32, #tpu.memory_space<vmem>>, vector<1x128xf32>
      %182 = vector.broadcast %180 : vector<8x1xf32> to vector<8x128xf32>
      %183 = vector.broadcast %181 : vector<1x128xf32> to vector<8x128xf32>
      %184 = arith.mulf %182, %183 : vector<8x128xf32>
      %185 = arith.addf %159, %184 : vector<8x128xf32>
      %cst_73 = arith.constant dense<0x7F800000> : vector<1xf32>
      %186 = vector.multi_reduction <minimumf>, %77, %cst_73 [0] : vector<8x1xf32> to vector<1xf32>
      %187 = vector.shape_cast %186 : vector<1xf32> to vector<1x1xf32>
      %cst_74 = arith.constant dense<0xFF800000> : vector<1xf32>
      %188 = vector.multi_reduction <maximumf>, %77, %cst_74 [0] : vector<8x1xf32> to vector<1xf32>
      %189 = vector.shape_cast %188 : vector<1xf32> to vector<1x1xf32>
      %190 = arith.subf %189, %187 : vector<1x1xf32>
      %cst_75 = arith.constant 0.000000e+00 : f32
      %191 = vector.broadcast %cst_75 : f32 to vector<1x1xf32>
      %192 = arith.cmpf oeq, %190, %191 : vector<1x1xf32>
      %cst_76 = arith.constant 1.000000e+00 : f32
      %193 = vector.broadcast %cst_76 : f32 to vector<1x1xf32>
      %194 = arith.select %192, %193, %190 : vector<1x1xi1>, vector<1x1xf32>
      %195 = vector.broadcast %187 : vector<1x1xf32> to vector<8x1xf32>
      %196 = arith.subf %77, %195 : vector<8x1xf32>
      %cst_77 = arith.constant 2.000000e+00 : f32
      %197 = vector.broadcast %cst_77 : f32 to vector<8x1xf32>
      %198 = arith.mulf %197, %196 : vector<8x1xf32>
      %199 = vector.broadcast %194 : vector<1x1xf32> to vector<8x1xf32>
      %200 = arith.divf %198, %199 : vector<8x1xf32>
      %cst_78 = arith.constant 1.000000e+00 : f32
      %201 = vector.broadcast %cst_78 : f32 to vector<8x1xf32>
      %202 = arith.subf %200, %201 : vector<8x1xf32>
      %c0_79 = arith.constant 0 : index
      %c4 = arith.constant 4 : index
      %203 = vector.load %arg5[%c0_79, %c4] : memref<1x5xf32, #tpu.memory_space<vmem>>, vector<1x1xf32>
      %204 = vector.broadcast %203 : vector<1x1xf32> to vector<8x1xf32>
      %205 = arith.subf %202, %204 : vector<8x1xf32>
      %206 = math.tanh %205 : vector<8x1xf32>
      %c4_80 = arith.constant 4 : index
      %c0_81 = arith.constant 0 : index
      %207 = vector.load %arg6[%c4_80, %c0_81] : memref<5x128xf32, #tpu.memory_space<vmem>>, vector<1x128xf32>
      %208 = vector.broadcast %206 : vector<8x1xf32> to vector<8x128xf32>
      %209 = vector.broadcast %207 : vector<1x128xf32> to vector<8x128xf32>
      %210 = arith.mulf %208, %209 : vector<8x128xf32>
      %211 = arith.addf %185, %210 : vector<8x128xf32>
      %cst_82 = arith.constant 0.000000e+00 : f32
      %212 = vector.broadcast %cst_82 : f32 to vector<8x128xf32>
      %213 = arith.maximumf %211, %212 : vector<8x128xf32>
      %c0_83 = arith.constant 0 : index
      %c0_84 = arith.constant 0 : index
      %214 = vector.load %arg8[%c0_83, %c0_84] : memref<128x128xf32, #tpu.memory_space<vmem>>, vector<128x128xf32>
      %cst_85 = arith.constant dense<0.000000e+00> : vector<8x128xf32>
      %215 = tpu.matmul %213, %214, %cst_85 {dimension_numbers = #tpu.dot_dimension_numbers<[1], [0], [0], [1], [0, 0, 1, 1], [], []>} : vector<8x128xf32>, vector<128x128xf32>, vector<8x128xf32> -> vector<8x128xf32>
      %c0_86 = arith.constant 0 : index
      %c0_87 = arith.constant 0 : index
      %216 = vector.load %arg9[%c0_86, %c0_87] : memref<1x128xf32, #tpu.memory_space<vmem>>, vector<1x128xf32>
      %217 = vector.broadcast %216 : vector<1x128xf32> to vector<8x128xf32>
      %218 = arith.addf %215, %217 : vector<8x128xf32>
      %c0_88 = arith.constant 0 : index
      %c0_89 = arith.constant 0 : index
      %219 = vector.load %arg11[%c0_88, %c0_89] : memref<8x128xf32, #tpu.memory_space<vmem>>, vector<8x128xf32>
      tpu.vector_store %arg11[%c0_88, %c0_89], %218 {strides = array<i32>} : memref<8x128xf32, #tpu.memory_space<vmem>>, vector<8x128xf32>,
    } else {
    }
    return
  }
  func.func @transform_0(%arg0: i32) -> (i32, i32) {
    %c0_i32 = arith.constant 0 : i32
    %c0_i32_0 = arith.constant 0 : i32
    return %c0_i32, %arg0 : i32, i32
  }
  func.func @transform_1(%arg0: i32) -> (i32, i32) {
    %c0_i32 = arith.constant 0 : i32
    %c0_i32_0 = arith.constant 0 : i32
    return %arg0, %c0_i32 : i32, i32
  }
  func.func @transform_2(%arg0: i32) -> (i32, i32) {
    %c0_i32 = arith.constant 0 : i32
    %c0_i32_0 = arith.constant 0 : i32
    %c0_i32_1 = arith.constant 0 : i32
    return %c0_i32, %c0_i32_0 : i32, i32
  }
  func.func @transform_3(%arg0: i32) -> (i32, i32) {
    %c0_i32 = arith.constant 0 : i32
    %c0_i32_0 = arith.constant 0 : i32
    %c0_i32_1 = arith.constant 0 : i32
    return %c0_i32, %c0_i32_0 : i32, i32
  }
  func.func @transform_4(%arg0: i32) -> (i32, i32) {
    %c0_i32 = arith.constant 0 : i32
    %c0_i32_0 = arith.constant 0 : i32
    %c0_i32_1 = arith.constant 0 : i32
    return %c0_i32, %c0_i32_0 : i32, i32
  }
  func.func @transform_5(%arg0: i32) -> (i32, i32) {
    %c0_i32 = arith.constant 0 : i32
    %c0_i32_0 = arith.constant 0 : i32
    %c0_i32_1 = arith.constant 0 : i32
    return %c0_i32, %c0_i32_0 : i32, i32
  }
  func.func @transform_6(%arg0: i32) -> (i32, i32) {
    %c0_i32 = arith.constant 0 : i32
    %c0_i32_0 = arith.constant 0 : i32
    %c0_i32_1 = arith.constant 0 : i32
    return %c0_i32, %c0_i32_0 : i32, i32
  }
  func.func @transform_7(%arg0: i32) -> (i32, i32) {
    %c0_i32 = arith.constant 0 : i32
    %c0_i32_0 = arith.constant 0 : i32
    %c0_i32_1 = arith.constant 0 : i32
    return %c0_i32, %c0_i32_0 : i32, i32
  }
  func.func @transform_8(%arg0: i32) -> (i32, i32) {
    %c0_i32 = arith.constant 0 : i32
    %c0_i32_0 = arith.constant 0 : i32
    %c0_i32_1 = arith.constant 0 : i32
    return %c0_i32, %c0_i32_0 : i32, i32
  }
  func.func @transform_9(%arg0: i32) -> (i32, i32) {
    %c0_i32 = arith.constant 0 : i32
    %c0_i32_0 = arith.constant 0 : i32
    %c0_i32_1 = arith.constant 0 : i32
    return %c0_i32, %c0_i32_0 : i32, i32
  }
  func.func @transform_10(%arg0: i32) -> (i32, i32) {
    %c0_i32 = arith.constant 0 : i32
    %c0_i32_0 = arith.constant 0 : i32
    %c0_i32_1 = arith.constant 0 : i32
    return %c0_i32, %c0_i32_0 : i32, i32
  }
}

</mosaic_0001>

<llo_original>
// kernel: ensemble_forward.1
$region0: #{ensemble_forward.1}
  #allocation0 [shape = 'u32[]', space=smem, size = 0x4, offset = 0x4, fixed_abs, tag = 'smem constant byte address 0x4 - core index']
  #allocation1 [shape = 'u32[144,128]{1,0:T(1,128)}', space=vmem, size = 0x12000, scoped, tag = 'internal scratch']
  %s0 = inlined_call_operand.vmem [shape: f32[8,1024], index: 0, kind: input, shape index: {}]
  %s1 = inlined_call_operand.vmem [shape: bf16[1024,128], index: 1, kind: input, shape index: {}]
  %s2 = inlined_call_operand.vmem [shape: f32[1,128], index: 2, kind: input, shape index: {}]
  %s3 = inlined_call_operand.vmem [shape: f32[1,128], index: 3, kind: input, shape index: {}]
  %s4 = inlined_call_operand.vmem [shape: f32[1,5], index: 4, kind: input, shape index: {}]
  %s5 = inlined_call_operand.vmem [shape: f32[5,128], index: 5, kind: input, shape index: {}]
  %s6 = inlined_call_operand.vmem [shape: f32[1,128], index: 6, kind: input, shape index: {}]
  %s7 = inlined_call_operand.hbm [shape: f32[128,128], index: 7, kind: input, shape index: {}]
  %s8 = inlined_call_operand.vmem [shape: f32[1,128], index: 8, kind: input, shape index: {}]
  %s9 = inlined_call_operand.hbm [shape: f32[8,128], index: 9, kind: output, shape index: {0}]
  %s10 = inlined_call_operand.vmem [shape: f32[8,128], index: 10, kind: output, shape index: {1}]
  %11 = xla_tuple %s9, %s10
  %s12 = sld [smem:[#allocation0]]
  $region66: #{ensemble_forward.1} parent=0
    _
  %s14 = ssub.s32 1, %s12
  %s15 = scalar_select 0, %s14, %s12
  $region1: #{ensemble_forward.1} parent=0
    #allocation2 [shape = 'u8[65536]{0}', space=vmem, size = 0x10000, scoped, tag = 'input window, operand 7, single buffered']
    #allocation3 [shape = 's32[1]{0}', space=sflag, size = 0x4, scoped, tag = 'scoped memory for ensemble_forward.1']
    #allocation4 [shape = 's32[1]{0}', space=sflag, size = 0x4, scoped, tag = 'scoped memory for ensemble_forward.1']
    #allocation5 [shape = 'u8[4096]{0}', space=vmem, size = 0x1000, scoped, tag = 'output window, operand 0, single buffered']
    %16 = vsyncpa [#allocation3], 0
    %17 = vsyncpa [#allocation4], 0
    // Predicated region
    $region2: #{ensemble_forward.1} parent=1 // pred_check
      _
    $region3: #{ensemble_forward.1} parent=1 // pred_check_branch
      %19 = sbr.rel (0) target = $region5
    $region4: #{ensemble_forward.1} parent=1 // pred_region
      _
    $region5: #{ensemble_forward.1} parent=1 // pred_fallthru
      _
    // Predicated region
    $region6: #{ensemble_forward.1} parent=1 // pred_check
      _
    $region7: #{ensemble_forward.1} parent=1 // pred_check_branch
      %21 = sbr.rel (0) target = $region9
    $region8: #{ensemble_forward.1} parent=1 // pred_region
      _
    $region9: #{ensemble_forward.1} parent=1 // pred_fallthru
      _
    // Predicated region
    $region10: #{ensemble_forward.1} parent=1 // pred_check
      _
    $region11: #{ensemble_forward.1} parent=1 // pred_check_branch
      %23 = sbr.rel (0) target = $region13
    $region12: #{ensemble_forward.1} parent=1 // pred_region
      _
    $region13: #{ensemble_forward.1} parent=1 // pred_fallthru
      _
    // Predicated region
    $region14: #{ensemble_forward.1} parent=1 // pred_check
      _
    $region15: #{ensemble_forward.1} parent=1 // pred_check_branch
      %25 = sbr.rel (0) target = $region17
    $region16: #{ensemble_forward.1} parent=1 // pred_region
      _
    $region17: #{ensemble_forward.1} parent=1 // pred_fallthru
      _
    // Predicated region
    $region18: #{ensemble_forward.1} parent=1 // pred_check
      _
    $region19: #{ensemble_forward.1} parent=1 // pred_check_branch
      %27 = sbr.rel (0) target = $region21
    $region20: #{ensemble_forward.1} parent=1 // pred_region
      _
    $region21: #{ensemble_forward.1} parent=1 // pred_fallthru
      _
    // Predicated region
    $region22: #{ensemble_forward.1} parent=1 // pred_check
      _
    $region23: #{ensemble_forward.1} parent=1 // pred_check_branch
      %29 = sbr.rel (0) target = $region25
    $region24: #{ensemble_forward.1} parent=1 // pred_region
      _
    $region25: #{ensemble_forward.1} parent=1 // pred_fallthru
      _
    // Predicated region
    $region26: #{ensemble_forward.1} parent=1 // pred_check
      _
    $region27: #{ensemble_forward.1} parent=1 // pred_check_branch
      %31 = sbr.rel (0) target = $region29
    $region28: #{ensemble_forward.1} parent=1 // pred_region
      _
    $region29: #{ensemble_forward.1} parent=1 // pred_fallthru
      _
    // Predicated region
    $region30: #{ensemble_forward.1} parent=1 // pred_check
      _
    $region31: #{ensemble_forward.1} parent=1 // pred_check_branch
      %33 = sbr.rel (0) target = $region33
    $region32: #{ensemble_forward.1} parent=1 // pred_region
      %s35 = ssub.s32 2048, 2048
      %36 = vsyncadd [#allocation3], %s35
      %s37 = sshll.u32 [#allocation2], 4
      %s38 = int_to_ptr.vmem [resolvable:$true] %s37
      %43 = dma.hbm_to_vmem [thread:$0]  %s7, 2048, %s38, [#allocation3], 128, 128, 8
    $region33: #{ensemble_forward.1} parent=1 // pred_fallthru
      _
    // Predicated region
    $region34: #{ensemble_forward.1} parent=1 // pred_check
      _
    $region35: #{ensemble_forward.1} parent=1 // pred_check_branch
      %45 = sbr.rel (0) target = $region37
    $region36: #{ensemble_forward.1} parent=1 // pred_region
      _
    $region37: #{ensemble_forward.1} parent=1 // pred_fallthru
      _
    // Predicated region
    $region38: #{ensemble_forward.1} parent=1 // pred_check
      _
    $region39: #{ensemble_forward.1} parent=1 // pred_check_branch
      %47 = sbr.rel (0) target = $region41
    $region40: #{ensemble_forward.1} parent=1 // pred_region
      %48 = dma.done [#allocation3], 2048
    $region41: #{ensemble_forward.1} parent=1 // pred_fallthru
      _
    %p50 = scmp.eq.s32.totalorder 0, 0
    // Predicated region
    $region42: #{ensemble_forward.1} parent=1 // pred_check
      %p51 = pneg %p50
    $region43: #{ensemble_forward.1} parent=1 // pred_check_branch
      %53 = sbr.rel (%p51) target = $region45
    $region44: #{ensemble_forward.1} parent=1 // pred_region
      %v54 = vld [vmem:[%s2] sm:$0x1]
      %v56 = vlaneseq
      %v57 = vshrl.u32 %v56, 7
      %v58 = vsub.s32 0, %v57
      %v59 = vrot.slane %v54, %v58
      %v61 = vadd.f32 %v59, 0.0
      %62 = vst [vmem:[#allocation5] sm:$0xff] %v61
    $region45: #{ensemble_forward.1} parent=1 // pred_fallthru
      _
    %v63 = vld [vmem:[#allocation5] sm:$0xff]
    %v64 = vld [vmem:[%s0] sm:$0xff]
    %v65 = vld [vmem:[%s0 + $0x8] sm:$0xff]
    %v66 = vld [vmem:[%s0 + $0x10] sm:$0xff]
    %v67 = vld [vmem:[%s0 + $0x18] sm:$0xff]
    %v68 = vld [vmem:[%s0 + $0x20] sm:$0xff]
    %v69 = vld [vmem:[%s0 + $0x28] sm:$0xff]
    %v70 = vld [vmem:[%s0 + $0x30] sm:$0xff]
    %v71 = vld [vmem:[%s0 + $0x38] sm:$0xff]
    %v72 = vpack.c.bf16 %v64, %v64
    %v73 = vpack.c.bf16 %v65, %v65
    %v74 = vpack.c.bf16 %v66, %v66
    %v75 = vpack.c.bf16 %v67, %v67
    %v76 = vpack.c.bf16 %v68, %v68
    %v77 = vpack.c.bf16 %v69, %v69
    %v78 = vpack.c.bf16 %v70, %v70
    %v79 = vpack.c.bf16 %v71, %v71
    %v80 = vld [vmem:[%s1] sm:$0xf]
    %v81 = vld [vmem:[%s1 + $0x4] sm:$0xf]
    %v82 = vld [vmem:[%s1 + $0x8] sm:$0xf]
    %v83 = vld [vmem:[%s1 + $0xc] sm:$0xf]
    %v84 = vld [vmem:[%s1 + $0x10] sm:$0xf]
    %v85 = vld [vmem:[%s1 + $0x14] sm:$0xf]
    %v86 = vld [vmem:[%s1 + $0x18] sm:$0xf]
    %v87 = vld [vmem:[%s1 + $0x1c] sm:$0xf]
    %v88 = vld [vmem:[%s1 + $0x20] sm:$0xf]
    %v89 = vld [vmem:[%s1 + $0x24] sm:$0xf]
    %v90 = vld [vmem:[%s1 + $0x28] sm:$0xf]
    %v91 = vld [vmem:[%s1 + $0x2c] sm:$0xf]
    %v92 = vld [vmem:[%s1 + $0x30] sm:$0xf]
    %v93 = vld [vmem:[%s1 + $0x34] sm:$0xf]
    %v94 = vld [vmem:[%s1 + $0x38] sm:$0xf]
    %v95 = vld [vmem:[%s1 + $0x3c] sm:$0xf]
    %v96 = vld [vmem:[%s1 + $0x40] sm:$0xf]
    %v97 = vld [vmem:[%s1 + $0x44] sm:$0xf]
    %v98 = vld [vmem:[%s1 + $0x48] sm:$0xf]
    %v99 = vld [vmem:[%s1 + $0x4c] sm:$0xf]
    %v100 = vld [vmem:[%s1 + $0x50] sm:$0xf]
    %v101 = vld [vmem:[%s1 + $0x54] sm:$0xf]
    %v102 = vld [vmem:[%s1 + $0x58] sm:$0xf]
    %v103 = vld [vmem:[%s1 + $0x5c] sm:$0xf]
    %v104 = vld [vmem:[%s1 + $0x60] sm:$0xf]
    %v105 = vld [vmem:[%s1 + $0x64] sm:$0xf]
    %v106 = vld [vmem:[%s1 + $0x68] sm:$0xf]
    %v107 = vld [vmem:[%s1 + $0x6c] sm:$0xf]
    %v108 = vld [vmem:[%s1 + $0x70] sm:$0xf]
    %v109 = vld [vmem:[%s1 + $0x74] sm:$0xf]
    %v110 = vld [vmem:[%s1 + $0x78] sm:$0xf]
    %v111 = vld [vmem:[%s1 + $0x7c] sm:$0xf]
    %v112 = vld [vmem:[%s1 + $0x80] sm:$0xf]
    %v113 = vld [vmem:[%s1 + $0x84] sm:$0xf]
    %v114 = vld [vmem:[%s1 + $0x88] sm:$0xf]
    %v115 = vld [vmem:[%s1 + $0x8c] sm:$0xf]
    %v116 = vld [vmem:[%s1 + $0x90] sm:$0xf]
    %v117 = vld [vmem:[%s1 + $0x94] sm:$0xf]
    %v118 = vld [vmem:[%s1 + $0x98] sm:$0xf]
    %v119 = vld [vmem:[%s1 + $0x9c] sm:$0xf]
    %v120 = vld [vmem:[%s1 + $0xa0] sm:$0xf]
    %v121 = vld [vmem:[%s1 + $0xa4] sm:$0xf]
    %v122 = vld [vmem:[%s1 + $0xa8] sm:$0xf]
    %v123 = vld [vmem:[%s1 + $0xac] sm:$0xf]
    %v124 = vld [vmem:[%s1 + $0xb0] sm:$0xf]
    %v125 = vld [vmem:[%s1 + $0xb4] sm:$0xf]
    %v126 = vld [vmem:[%s1 + $0xb8] sm:$0xf]
    %v127 = vld [vmem:[%s1 + $0xbc] sm:$0xf]
    %v128 = vld [vmem:[%s1 + $0xc0] sm:$0xf]
    %v129 = vld [vmem:[%s1 + $0xc4] sm:$0xf]
    %v130 = vld [vmem:[%s1 + $0xc8] sm:$0xf]
    %v131 = vld [vmem:[%s1 + $0xcc] sm:$0xf]
    %v132 = vld [vmem:[%s1 + $0xd0] sm:$0xf]
    %v133 = vld [vmem:[%s1 + $0xd4] sm:$0xf]
    %v134 = vld [vmem:[%s1 + $0xd8] sm:$0xf]
    %v135 = vld [vmem:[%s1 + $0xdc] sm:$0xf]
    %v136 = vld [vmem:[%s1 + $0xe0] sm:$0xf]
    %v137 = vld [vmem:[%s1 + $0xe4] sm:$0xf]
    %v138 = vld [vmem:[%s1 + $0xe8] sm:$0xf]
    %v139 = vld [vmem:[%s1 + $0xec] sm:$0xf]
    %v140 = vld [vmem:[%s1 + $0xf0] sm:$0xf]
    %v141 = vld [vmem:[%s1 + $0xf4] sm:$0xf]
    %v142 = vld [vmem:[%s1 + $0xf8] sm:$0xf]
    %v143 = vld [vmem:[%s1 + $0xfc] sm:$0xf]
    %v144 = vld [vmem:[%s1 + $0x100] sm:$0xf]
    %v145 = vld [vmem:[%s1 + $0x104] sm:$0xf]
    %v146 = vld [vmem:[%s1 + $0x108] sm:$0xf]
    %v147 = vld [vmem:[%s1 + $0x10c] sm:$0xf]
    %v148 = vld [vmem:[%s1 + $0x110] sm:$0xf]
    %v149 = vld [vmem:[%s1 + $0x114] sm:$0xf]
    %v150 = vld [vmem:[%s1 + $0x118] sm:$0xf]
    %v151 = vld [vmem:[%s1 + $0x11c] sm:$0xf]
    %v152 = vld [vmem:[%s1 + $0x120] sm:$0xf]
    %v153 = vld [vmem:[%s1 + $0x124] sm:$0xf]
    %v154 = vld [vmem:[%s1 + $0x128] sm:$0xf]
    %v155 = vld [vmem:[%s1 + $0x12c] sm:$0xf]
    %v156 = vld [vmem:[%s1 + $0x130] sm:$0xf]
    %v157 = vld [vmem:[%s1 + $0x134] sm:$0xf]
    %v158 = vld [vmem:[%s1 + $0x138] sm:$0xf]
    %v159 = vld [vmem:[%s1 + $0x13c] sm:$0xf]
    %v160 = vld [vmem:[%s1 + $0x140] sm:$0xf]
    %v161 = vld [vmem:[%s1 + $0x144] sm:$0xf]
    %v162 = vld [vmem:[%s1 + $0x148] sm:$0xf]
    %v163 = vld [vmem:[%s1 + $0x14c] sm:$0xf]
    %v164 = vld [vmem:[%s1 + $0x150] sm:$0xf]
    %v165 = vld [vmem:[%s1 + $0x154] sm:$0xf]
    %v166 = vld [vmem:[%s1 + $0x158] sm:$0xf]
    %v167 = vld [vmem:[%s1 + $0x15c] sm:$0xf]
    %v168 = vld [vmem:[%s1 + $0x160] sm:$0xf]
    %v169 = vld [vmem:[%s1 + $0x164] sm:$0xf]
    %v170 = vld [vmem:[%s1 + $0x168] sm:$0xf]
    %v171 = vld [vmem:[%s1 + $0x16c] sm:$0xf]
    %v172 = vld [vmem:[%s1 + $0x170] sm:$0xf]
    %v173 = vld [vmem:[%s1 + $0x174] sm:$0xf]
    %v174 = vld [vmem:[%s1 + $0x178] sm:$0xf]
    %v175 = vld [vmem:[%s1 + $0x17c] sm:$0xf]
    %v176 = vld [vmem:[%s1 + $0x180] sm:$0xf]
    %v177 = vld [vmem:[%s1 + $0x184] sm:$0xf]
    %v178 = vld [vmem:[%s1 + $0x188] sm:$0xf]
    %v179 = vld [vmem:[%s1 + $0x18c] sm:$0xf]
    %v180 = vld [vmem:[%s1 + $0x190] sm:$0xf]
    %v181 = vld [vmem:[%s1 + $0x194] sm:$0xf]
    %v182 = vld [vmem:[%s1 + $0x198] sm:$0xf]
    %v183 = vld [vmem:[%s1 + $0x19c] sm:$0xf]
    %v184 = vld [vmem:[%s1 + $0x1a0] sm:$0xf]
    %v185 = vld [vmem:[%s1 + $0x1a4] sm:$0xf]
    %v186 = vld [vmem:[%s1 + $0x1a8] sm:$0xf]
    %v187 = vld [vmem:[%s1 + $0x1ac] sm:$0xf]
    %v188 = vld [vmem:[%s1 + $0x1b0] sm:$0xf]
    %v189 = vld [vmem:[%s1 + $0x1b4] sm:$0xf]
    %v190 = vld [vmem:[%s1 + $0x1b8] sm:$0xf]
    %v191 = vld [vmem:[%s1 + $0x1bc] sm:$0xf]
    %v192 = vld [vmem:[%s1 + $0x1c0] sm:$0xf]
    %v193 = vld [vmem:[%s1 + $0x1c4] sm:$0xf]
    %v194 = vld [vmem:[%s1 + $0x1c8] sm:$0xf]
    %v195 = vld [vmem:[%s1 + $0x1cc] sm:$0xf]
    %v196 = vld [vmem:[%s1 + $0x1d0] sm:$0xf]
    %v197 = vld [vmem:[%s1 + $0x1d4] sm:$0xf]
    %v198 = vld [vmem:[%s1 + $0x1d8] sm:$0xf]
    %v199 = vld [vmem:[%s1 + $0x1dc] sm:$0xf]
    %v200 = vld [vmem:[%s1 + $0x1e0] sm:$0xf]
    %v201 = vld [vmem:[%s1 + $0x1e4] sm:$0xf]
    %v202 = vld [vmem:[%s1 + $0x1e8] sm:$0xf]
    %v203 = vld [vmem:[%s1 + $0x1ec] sm:$0xf]
    %v204 = vld [vmem:[%s1 + $0x1f0] sm:$0xf]
    %v205 = vld [vmem:[%s1 + $0x1f4] sm:$0xf]
    %v206 = vld [vmem:[%s1 + $0x1f8] sm:$0xf]
    %v207 = vld [vmem:[%s1 + $0x1fc] sm:$0xf]
    %v336 = vunpack.c.l.b16 %v80
    %v337 = vunpack.c.l.b16 %v81
    %v338 = vunpack.c.l.b16 %v82
    %v339 = vunpack.c.l.b16 %v83
    %v340 = vunpack.c.l.b16 %v84
    %v341 = vunpack.c.l.b16 %v85
    %v342 = vunpack.c.l.b16 %v86
    %v343 = vunpack.c.l.b16 %v87
    %v344 = vunpack.c.l.b16 %v88
    %v345 = vunpack.c.l.b16 %v89
    %v346 = vunpack.c.l.b16 %v90
    %v347 = vunpack.c.l.b16 %v91
    %v348 = vunpack.c.l.b16 %v92
    %v349 = vunpack.c.l.b16 %v93
    %v350 = vunpack.c.l.b16 %v94
    %v351 = vunpack.c.l.b16 %v95
    %v352 = vunpack.c.l.b16 %v96
    %v353 = vunpack.c.l.b16 %v97
    %v354 = vunpack.c.l.b16 %v98
    %v355 = vunpack.c.l.b16 %v99
    %v356 = vunpack.c.l.b16 %v100
    %v357 = vunpack.c.l.b16 %v101
    %v358 = vunpack.c.l.b16 %v102
    %v359 = vunpack.c.l.b16 %v103
    %v360 = vunpack.c.l.b16 %v104
    %v361 = vunpack.c.l.b16 %v105
    %v362 = vunpack.c.l.b16 %v106
    %v363 = vunpack.c.l.b16 %v107
    %v364 = vunpack.c.l.b16 %v108
    %v365 = vunpack.c.l.b16 %v109
    %v366 = vunpack.c.l.b16 %v110
    %v367 = vunpack.c.l.b16 %v111
    %v368 = vunpack.c.l.b16 %v112
    %v369 = vunpack.c.l.b16 %v113
    %v370 = vunpack.c.l.b16 %v114
    %v371 = vunpack.c.l.b16 %v115
    %v372 = vunpack.c.l.b16 %v116
    %v373 = vunpack.c.l.b16 %v117
    %v374 = vunpack.c.l.b16 %v118
    %v375 = vunpack.c.l.b16 %v119
    %v376 = vunpack.c.l.b16 %v120
    %v377 = vunpack.c.l.b16 %v121
    %v378 = vunpack.c.l.b16 %v122
    %v379 = vunpack.c.l.b16 %v123
    %v380 = vunpack.c.l.b16 %v124
    %v381 = vunpack.c.l.b16 %v125
    %v382 = vunpack.c.l.b16 %v126
    %v383 = vunpack.c.l.b16 %v127
    %v384 = vunpack.c.l.b16 %v128
    %v385 = vunpack.c.l.b16 %v129
    %v386 = vunpack.c.l.b16 %v130
    %v387 = vunpack.c.l.b16 %v131
    %v388 = vunpack.c.l.b16 %v132
    %v389 = vunpack.c.l.b16 %v133
    %v390 = vunpack.c.l.b16 %v134
    %v391 = vunpack.c.l.b16 %v135
    %v392 = vunpack.c.l.b16 %v136
    %v393 = vunpack.c.l.b16 %v137
    %v394 = vunpack.c.l.b16 %v138
    %v395 = vunpack.c.l.b16 %v139
    %v396 = vunpack.c.l.b16 %v140
    %v397 = vunpack.c.l.b16 %v141
    %v398 = vunpack.c.l.b16 %v142
    %v399 = vunpack.c.l.b16 %v143
    %v400 = vunpack.c.l.b16 %v144
    %v401 = vunpack.c.l.b16 %v145
    %v402 = vunpack.c.l.b16 %v146
    %v403 = vunpack.c.l.b16 %v147
    %v404 = vunpack.c.l.b16 %v148
    %v405 = vunpack.c.l.b16 %v149
    %v406 = vunpack.c.l.b16 %v150
    %v407 = vunpack.c.l.b16 %v151
    %v408 = vunpack.c.l.b16 %v152
    %v409 = vunpack.c.l.b16 %v153
    %v410 = vunpack.c.l.b16 %v154
    %v411 = vunpack.c.l.b16 %v155
    %v412 = vunpack.c.l.b16 %v156
    %v413 = vunpack.c.l.b16 %v157
    %v414 = vunpack.c.l.b16 %v158
    %v415 = vunpack.c.l.b16 %v159
    %v416 = vunpack.c.l.b16 %v160
    %v417 = vunpack.c.l.b16 %v161
    %v418 = vunpack.c.l.b16 %v162
    %v419 = vunpack.c.l.b16 %v163
    %v420 = vunpack.c.l.b16 %v164
    %v421 = vunpack.c.l.b16 %v165
    %v422 = vunpack.c.l.b16 %v166
    %v423 = vunpack.c.l.b16 %v167
    %v424 = vunpack.c.l.b16 %v168
    %v425 = vunpack.c.l.b16 %v169
    %v426 = vunpack.c.l.b16 %v170
    %v427 = vunpack.c.l.b16 %v171
    %v428 = vunpack.c.l.b16 %v172
    %v429 = vunpack.c.l.b16 %v173
    %v430 = vunpack.c.l.b16 %v174
    %v431 = vunpack.c.l.b16 %v175
    %v432 = vunpack.c.l.b16 %v176
    %v433 = vunpack.c.l.b16 %v177
    %v434 = vunpack.c.l.b16 %v178
    %v435 = vunpack.c.l.b16 %v179
    %v436 = vunpack.c.l.b16 %v180
    %v437 = vunpack.c.l.b16 %v181
    %v438 = vunpack.c.l.b16 %v182
    %v439 = vunpack.c.l.b16 %v183
    %v440 = vunpack.c.l.b16 %v184
    %v441 = vunpack.c.l.b16 %v185
    %v442 = vunpack.c.l.b16 %v186
    %v443 = vunpack.c.l.b16 %v187
    %v444 = vunpack.c.l.b16 %v188
    %v445 = vunpack.c.l.b16 %v189
    %v446 = vunpack.c.l.b16 %v190
    %v447 = vunpack.c.l.b16 %v191
    %v448 = vunpack.c.l.b16 %v192
    %v449 = vunpack.c.l.b16 %v193
    %v450 = vunpack.c.l.b16 %v194
    %v451 = vunpack.c.l.b16 %v195
    %v452 = vunpack.c.l.b16 %v196
    %v453 = vunpack.c.l.b16 %v197
    %v454 = vunpack.c.l.b16 %v198
    %v455 = vunpack.c.l.b16 %v199
    %v456 = vunpack.c.l.b16 %v200
    %v457 = vunpack.c.l.b16 %v201
    %v458 = vunpack.c.l.b16 %v202
    %v459 = vunpack.c.l.b16 %v203
    %v460 = vunpack.c.l.b16 %v204
    %v461 = vunpack.c.l.b16 %v205
    %v462 = vunpack.c.l.b16 %v206
    %v463 = vunpack.c.l.b16 %v207
    %v464 = vpack.c.b16 %v337, %v336
    %v465 = vpack.c.b16 %v339, %v338
    %v466 = vpack.c.b16 %v341, %v340
    %v467 = vpack.c.b16 %v343, %v342
    %v468 = vpack.c.b16 %v345, %v344
    %v469 = vpack.c.b16 %v347, %v346
    %v470 = vpack.c.b16 %v349, %v348
    %v471 = vpack.c.b16 %v351, %v350
    %v472 = vpack.c.b16 %v353, %v352
    %v473 = vpack.c.b16 %v355, %v354
    %v474 = vpack.c.b16 %v357, %v356
    %v475 = vpack.c.b16 %v359, %v358
    %v476 = vpack.c.b16 %v361, %v360
    %v477 = vpack.c.b16 %v363, %v362
    %v478 = vpack.c.b16 %v365, %v364
    %v479 = vpack.c.b16 %v367, %v366
    %v480 = vpack.c.b16 %v369, %v368
    %v481 = vpack.c.b16 %v371, %v370
    %v482 = vpack.c.b16 %v373, %v372
    %v483 = vpack.c.b16 %v375, %v374
    %v484 = vpack.c.b16 %v377, %v376
    %v485 = vpack.c.b16 %v379, %v378
    %v486 = vpack.c.b16 %v381, %v380
    %v487 = vpack.c.b16 %v383, %v382
    %v488 = vpack.c.b16 %v385, %v384
    %v489 = vpack.c.b16 %v387, %v386
    %v490 = vpack.c.b16 %v389, %v388
    %v491 = vpack.c.b16 %v391, %v390
    %v492 = vpack.c.b16 %v393, %v392
    %v493 = vpack.c.b16 %v395, %v394
    %v494 = vpack.c.b16 %v397, %v396
    %v495 = vpack.c.b16 %v399, %v398
    %v496 = vpack.c.b16 %v401, %v400
    %v497 = vpack.c.b16 %v403, %v402
    %v498 = vpack.c.b16 %v405, %v404
    %v499 = vpack.c.b16 %v407, %v406
    %v500 = vpack.c.b16 %v409, %v408
    %v501 = vpack.c.b16 %v411, %v410
    %v502 = vpack.c.b16 %v413, %v412
    %v503 = vpack.c.b16 %v415, %v414
    %v504 = vpack.c.b16 %v417, %v416
    %v505 = vpack.c.b16 %v419, %v418
    %v506 = vpack.c.b16 %v421, %v420
    %v507 = vpack.c.b16 %v423, %v422
    %v508 = vpack.c.b16 %v425, %v424
    %v509 = vpack.c.b16 %v427, %v426
    %v510 = vpack.c.b16 %v429, %v428
    %v511 = vpack.c.b16 %v431, %v430
    %v512 = vpack.c.b16 %v433, %v432
    %v513 = vpack.c.b16 %v435, %v434
    %v514 = vpack.c.b16 %v437, %v436
    %v515 = vpack.c.b16 %v439, %v438
    %v516 = vpack.c.b16 %v441, %v440
    %v517 = vpack.c.b16 %v443, %v442
    %v518 = vpack.c.b16 %v445, %v444
    %v519 = vpack.c.b16 %v447, %v446
    %v520 = vpack.c.b16 %v449, %v448
    %v521 = vpack.c.b16 %v451, %v450
    %v522 = vpack.c.b16 %v453, %v452
    %v523 = vpack.c.b16 %v455, %v454
    %v524 = vpack.c.b16 %v457, %v456
    %v525 = vpack.c.b16 %v459, %v458
    %v526 = vpack.c.b16 %v461, %v460
    %v527 = vpack.c.b16 %v463, %v462
    %592 = vmatprep.subr.bf16.mxu0 0
    %593 = vmatpush1.bf16.msra.mxu0 %v464
    %594 = vmatprep.subr.bf16.mxu0 0
    %595 = vmatpush1.bf16.msra.mxu0 %v465
    %596 = vmatprep.subr.bf16.mxu0 0
    %597 = vmatpush1.bf16.msra.mxu0 %v466
    %598 = vmatprep.subr.bf16.mxu0 0
    %599 = vmatpush1.bf16.msra.mxu0 %v467
    %600 = vmatprep.subr.bf16.mxu0 0
    %601 = vmatpush1.bf16.msra.mxu0 %v468
    %602 = vmatprep.subr.bf16.mxu0 0
    %603 = vmatpush1.bf16.msra.mxu0 %v469
    %604 = vmatprep.subr.bf16.mxu0 0
    %605 = vmatpush1.bf16.msra.mxu0 %v470
    %606 = vmatprep.subr.bf16.mxu0 0
    %607 = vmatpush1.bf16.msra.mxu0 %v471
    %608 = vmatprep.subr.bf16.mxu0 0
    %609 = vmatpush1.bf16.msra.mxu0 %v472
    %610 = vmatprep.subr.bf16.mxu0 0
    %611 = vmatpush1.bf16.msra.mxu0 %v473
    %612 = vmatprep.subr.bf16.mxu0 0
    %613 = vmatpush1.bf16.msra.mxu0 %v474
    %614 = vmatprep.subr.bf16.mxu0 0
    %615 = vmatpush1.bf16.msra.mxu0 %v475
    %616 = vmatprep.subr.bf16.mxu0 0
    %617 = vmatpush1.bf16.msra.mxu0 %v476
    %618 = vmatprep.subr.bf16.mxu0 0
    %619 = vmatpush1.bf16.msra.mxu0 %v477
    %620 = vmatprep.subr.bf16.mxu0 0
    %621 = vmatpush1.bf16.msra.mxu0 %v478
    %622 = vmatprep.subr.bf16.mxu0 0
    %623 = vmatpush1.bf16.msra.mxu0 %v479
    %624 = vmatprep.mubr.bf16.mxu0 %v73
    %625 = vmatmul.mubr.bf16.gmra.mrb[0].mxu0 %v72
    %v626 = vpop.f32.mrb[0].mxu0
    %v627 = vadd.f32 0.0, %v626
    %v628 = vpop.f32.mrb[0].mxu0
    %v629 = vpop.f32.mrb[0].mxu0
    %v630 = vpop.f32.mrb[0].mxu0
    %631 = vdwg.mxu0
    %632 = vmatprep.subr.bf16.mxu0 0
    %633 = vmatpush1.bf16.msra.mxu0 %v480
    %634 = vmatprep.subr.bf16.mxu0 0
    %635 = vmatpush1.bf16.msra.mxu0 %v481
    %636 = vmatprep.subr.bf16.mxu0 0
    %637 = vmatpush1.bf16.msra.mxu0 %v482
    %638 = vmatprep.subr.bf16.mxu0 0
    %639 = vmatpush1.bf16.msra.mxu0 %v483
    %640 = vmatprep.subr.bf16.mxu0 0
    %641 = vmatpush1.bf16.msra.mxu0 %v484
    %642 = vmatprep.subr.bf16.mxu0 0
    %643 = vmatpush1.bf16.msra.mxu0 %v485
    %644 = vmatprep.subr.bf16.mxu0 0
    %645 = vmatpush1.bf16.msra.mxu0 %v486
    %646 = vmatprep.subr.bf16.mxu0 0
    %647 = vmatpush1.bf16.msra.mxu0 %v487
    %648 = vmatprep.subr.bf16.mxu0 0
    %649 = vmatpush1.bf16.msra.mxu0 %v488
    %650 = vmatprep.subr.bf16.mxu0 0
    %651 = vmatpush1.bf16.msra.mxu0 %v489
    %652 = vmatprep.subr.bf16.mxu0 0
    %653 = vmatpush1.bf16.msra.mxu0 %v490
    %654 = vmatprep.subr.bf16.mxu0 0
    %655 = vmatpush1.bf16.msra.mxu0 %v491
    %656 = vmatprep.subr.bf16.mxu0 0
    %657 = vmatpush1.bf16.msra.mxu0 %v492
    %658 = vmatprep.subr.bf16.mxu0 0
    %659 = vmatpush1.bf16.msra.mxu0 %v493
    %660 = vmatprep.subr.bf16.mxu0 0
    %661 = vmatpush1.bf16.msra.mxu0 %v494
    %662 = vmatprep.subr.bf16.mxu0 0
    %663 = vmatpush1.bf16.msra.mxu0 %v495
    %664 = vmatprep.mubr.bf16.mxu0 %v75
    %665 = vmatmul.mubr.bf16.gmra.mrb[0].mxu0 %v74
    %v666 = vpop.f32.mrb[0].mxu0
    %v667 = vadd.f32 %v627, %v666
    %v668 = vpop.f32.mrb[0].mxu0
    %v669 = vpop.f32.mrb[0].mxu0
    %v670 = vpop.f32.mrb[0].mxu0
    %671 = vdwg.mxu0
    %672 = vmatprep.subr.bf16.mxu0 0
    %673 = vmatpush1.bf16.msra.mxu0 %v496
    %674 = vmatprep.subr.bf16.mxu0 0
    %675 = vmatpush1.bf16.msra.mxu0 %v497
    %676 = vmatprep.subr.bf16.mxu0 0
    %677 = vmatpush1.bf16.msra.mxu0 %v498
    %678 = vmatprep.subr.bf16.mxu0 0
    %679 = vmatpush1.bf16.msra.mxu0 %v499
    %680 = vmatprep.subr.bf16.mxu0 0
    %681 = vmatpush1.bf16.msra.mxu0 %v500
    %682 = vmatprep.subr.bf16.mxu0 0
    %683 = vmatpush1.bf16.msra.mxu0 %v501
    %684 = vmatprep.subr.bf16.mxu0 0
    %685 = vmatpush1.bf16.msra.mxu0 %v502
    %686 = vmatprep.subr.bf16.mxu0 0
    %687 = vmatpush1.bf16.msra.mxu0 %v503
    %688 = vmatprep.subr.bf16.mxu0 0
    %689 = vmatpush1.bf16.msra.mxu0 %v504
    %690 = vmatprep.subr.bf16.mxu0 0
    %691 = vmatpush1.bf16.msra.mxu0 %v505
    %692 = vmatprep.subr.bf16.mxu0 0
    %693 = vmatpush1.bf16.msra.mxu0 %v506
    %694 = vmatprep.subr.bf16.mxu0 0
    %695 = vmatpush1.bf16.msra.mxu0 %v507
    %696 = vmatprep.subr.bf16.mxu0 0
    %697 = vmatpush1.bf16.msra.mxu0 %v508
    %698 = vmatprep.subr.bf16.mxu0 0
    %699 = vmatpush1.bf16.msra.mxu0 %v509
    %700 = vmatprep.subr.bf16.mxu0 0
    %701 = vmatpush1.bf16.msra.mxu0 %v510
    %702 = vmatprep.subr.bf16.mxu0 0
    %703 = vmatpush1.bf16.msra.mxu0 %v511
    %704 = vmatprep.mubr.bf16.mxu0 %v77
    %705 = vmatmul.mubr.bf16.gmra.mrb[0].mxu0 %v76
    %v706 = vpop.f32.mrb[0].mxu0
    %v707 = vadd.f32 %v667, %v706
    %v708 = vpop.f32.mrb[0].mxu0
    %v709 = vpop.f32.mrb[0].mxu0
    %v710 = vpop.f32.mrb[0].mxu0
    %711 = vdwg.mxu0
    %712 = vmatprep.subr.bf16.mxu0 0
    %713 = vmatpush1.bf16.msra.mxu0 %v512
    %714 = vmatprep.subr.bf16.mxu0 0
    %715 = vmatpush1.bf16.msra.mxu0 %v513
    %716 = vmatprep.subr.bf16.mxu0 0
    %717 = vmatpush1.bf16.msra.mxu0 %v514
    %718 = vmatprep.subr.bf16.mxu0 0
    %719 = vmatpush1.bf16.msra.mxu0 %v515
    %720 = vmatprep.subr.bf16.mxu0 0
    %721 = vmatpush1.bf16.msra.mxu0 %v516
    %722 = vmatprep.subr.bf16.mxu0 0
    %723 = vmatpush1.bf16.msra.mxu0 %v517
    %724 = vmatprep.subr.bf16.mxu0 0
    %725 = vmatpush1.bf16.msra.mxu0 %v518
    %726 = vmatprep.subr.bf16.mxu0 0
    %727 = vmatpush1.bf16.msra.mxu0 %v519
    %728 = vmatprep.subr.bf16.mxu0 0
    %729 = vmatpush1.bf16.msra.mxu0 %v520
    %730 = vmatprep.subr.bf16.mxu0 0
    %731 = vmatpush1.bf16.msra.mxu0 %v521
    %732 = vmatprep.subr.bf16.mxu0 0
    %733 = vmatpush1.bf16.msra.mxu0 %v522
    %734 = vmatprep.subr.bf16.mxu0 0
    %735 = vmatpush1.bf16.msra.mxu0 %v523
    %736 = vmatprep.subr.bf16.mxu0 0
    %737 = vmatpush1.bf16.msra.mxu0 %v524
    %738 = vmatprep.subr.bf16.mxu0 0
    %739 = vmatpush1.bf16.msra.mxu0 %v525
    %740 = vmatprep.subr.bf16.mxu0 0
    %741 = vmatpush1.bf16.msra.mxu0 %v526
    %742 = vmatprep.subr.bf16.mxu0 0
    %743 = vmatpush1.bf16.msra.mxu0 %v527
    %744 = vmatprep.mubr.bf16.mxu0 %v79
    %745 = vmatmul.mubr.bf16.gmra.mrb[0].mxu0 %v78
    %v746 = vpop.f32.mrb[0].mxu0
    %v747 = vadd.f32 %v707, %v746
    %v748 = vpop.f32.mrb[0].mxu0
    %v749 = vpop.f32.mrb[0].mxu0
    %v750 = vpop.f32.mrb[0].mxu0
    %751 = vdwg.mxu0
    %v752 = vadd.f32 %v63, %v747
    %753 = vst [vmem:[#allocation5] sm:$0xff] %v752
    // Predicated region
    $region46: #{ensemble_forward.1} parent=1 // pred_check
      %p754 = pneg %p50
    $region47: #{ensemble_forward.1} parent=1 // pred_check_branch
      %756 = sbr.rel (%p754) target = $region49
    $region48: #{ensemble_forward.1} parent=1 // pred_region
      %v757 = vld [vmem:[#allocation5] sm:$0xff]
      %v758 = vlaneseq
      %v759 = vand.u32 %v758, 127
      %vm760 = vcmp.lt.s32.totalorder %v759, 10
      %v761 = vsel %vm760, %v757, -inf
      %762 = vmax.xlane.f32.xlu0 %v761
      %v763 = vpop.xlane.xlu0 %762
      %v764 = vsub.f32 %v761, %v763
      %v765 = vmul.f32 %v764, 1.442695
      %v766 = vpow.pop %v765
      %767 = vadd.xlane.f32.xlu0 %v766
      %v768 = vpop.xlane.xlu0 %767
      %v769 = vrcp.pop %v768
      %v770 = vmul.f32 %v766, %v769
      %771 = vmax.xlane.f32.xlu0 %v770
      %v772 = vpop.xlane.xlu0 %771
      %v773 = vmul.f32 %v770, %v770
      %774 = vadd.xlane.f32.xlu0 %v773
      %v775 = vpop.xlane.xlu0 %774
      %v776 = vrcp.pop %v775
      %v777 = vmul.f32 1.0, %v776
      %v778 = vsub.f32 1.0, %v777
      %v779 = vadd.f32 %v770, 1e-10
      %v780 = vlog2.pop %v779
      %v781 = vmul.f32 %v780, 0.6931472
      %v782 = vmul.f32 %v770, %v781
      %783 = vadd.xlane.f32.xlu0 %v782
      %v784 = vpop.xlane.xlu0 %783
      %v785 = vld [vmem:[%s3] sm:$0x1]
      %v787 = vlaneseq
      %v788 = vshrl.u32 %v787, 7
      %v789 = vsub.s32 0, %v788
      %v790 = vrot.slane %v785, %v789
      %v792 = vmul.f32 %v757, %v790
      %v793 = vsel %vm760, %v792, -inf
      %794 = vmax.xlane.f32.xlu0 %v793
      %v795 = vpop.xlane.xlu0 %794
      %vm796 = vcmp.eq.f32.partialorder %v793, %v795
      %v797 = vsel %vm796, %v759, 128
      %v798 = vand.u32 %v797, 65535
      %v799 = vshra.s32 %v797, 16
      %v800 = vcvt.s32.f32 %v798
      %v801 = vcvt.s32.f32 %v799
      %802 = vmin.xlane.f32.xlu0 %v801
      %v803 = vpop.xlane.xlu0 %802
      %vm804 = vcmp.eq.f32.partialorder %v801, %v803
      %v805 = vsel %vm804, %v800, inf
      %806 = vmin.xlane.f32.xlu0 %v805
      %v807 = vpop.xlane.xlu0 %806
      %v808 = vcvt.f32.s32 %v807
      %v809 = vcvt.f32.s32 %v803
      %v810 = vshll.u32 %v809, 16
      %v811 = vadd.s32 %v810, %v808
      %vm812 = vcmp.eq.s32.totalorder %v759, %v811
      %v813 = vsel %vm812, -inf, %v793
      %814 = vmax.xlane.f32.xlu0 %v813
      %v815 = vpop.xlane.xlu0 %814
      %v816 = vsub.f32 %v795, %v815
      %vm817 = vcmp.eq.f32.partialorder %v761, %v763
      %v818 = vsel %vm817, %v759, 128
      %v819 = vand.u32 %v818, 65535
      %v820 = vshra.s32 %v818, 16
      %v821 = vcvt.s32.f32 %v819
      %v822 = vcvt.s32.f32 %v820
      %823 = vmin.xlane.f32.xlu0 %v822
      %v824 = vpop.xlane.xlu0 %823
      %vm825 = vcmp.eq.f32.partialorder %v822, %v824
      %v826 = vsel %vm825, %v821, inf
      %827 = vmin.xlane.f32.xlu0 %v826
      %v828 = vpop.xlane.xlu0 %827
      %v829 = vcvt.f32.s32 %v828
      %v830 = vcvt.f32.s32 %v824
      %v831 = vshll.u32 %v830, 16
      %v832 = vadd.s32 %v831, %v829
      %vm833 = vcmp.eq.s32.totalorder %v759, %v832
      %v834 = vsel %vm833, -inf, %v761
      %835 = vmax.xlane.f32.xlu0 %v834
      %v836 = vpop.xlane.xlu0 %835
      %v837 = vsub.f32 %v763, %v836
      %v838 = vld [vmem:[%s6] sm:$0x1]
      %v840 = vlaneseq
      %v841 = vshrl.u32 %v840, 7
      %v842 = vsub.s32 0, %v841
      %v843 = vrot.slane %v838, %v842
      %v845 = vadd.f32 %v843, 0.0
      %v846 = vrot.slane %v772, 4
      %v847 = vmin.f32 %v772, %v846
      %v848 = vrot.slane %v847, 2
      %v849 = vmin.f32 %v847, %v848
      %v850 = vrot.slane %v849, 1
      %v851 = vmin.f32 %v849, %v850
      %v852 = vrot.slane %v772, 4
      %v853 = vmax.f32 %v772, %v852
      %v854 = vrot.slane %v853, 2
      %v855 = vmax.f32 %v853, %v854
      %v856 = vrot.slane %v855, 1
      %v857 = vmax.f32 %v855, %v856
      %v858 = vsub.f32 %v857, %v851
      %vm859 = vcmp.eq.f32.partialorder %v858, 0.0
      %v860 = vsel %vm859, 1.0, %v858
      %v861 = vsub.f32 %v772, %v851
      %v862 = vmul.f32 %v861, 2.0
      %v863 = vrcp.pop %v860
      %v864 = vmul.f32 %v862, %v863
      %v865 = vsub.f32 %v864, 1.0
      %v866 = vld [vmem:[%s4] sm:$0x1]
      %v868 = vlaneseq
      %v869 = vshrl.u32 %v868, 7
      %v870 = vsub.s32 0, %v869
      %v871 = vrot.slane %v866, %v870
      %v873 = vsub.f32 %v865, %v871
      %v874 = vtanh.pop %v873
      %v875 = vld [vmem:[%s5] sm:$0x1]
      %877 = vset.pattern.permute.xlu0 0
      %878 = vperm.xlu0 %877, %v874
      %v879 = vpop.permute.xlu0 %878
      %v881 = vlaneseq
      %v882 = vshrl.u32 %v881, 7
      %v883 = vsub.s32 0, %v882
      %v884 = vrot.slane %v875, %v883
      %v885 = vmul.f32 %v879, %v884
      %v886 = vadd.f32 %v845, %v885
      %v887 = vrot.slane %v778, 4
      %v888 = vmin.f32 %v778, %v887
      %v889 = vrot.slane %v888, 2
      %v890 = vmin.f32 %v888, %v889
      %v891 = vrot.slane %v890, 1
      %v892 = vmin.f32 %v890, %v891
      %v893 = vrot.slane %v778, 4
      %v894 = vmax.f32 %v778, %v893
      %v895 = vrot.slane %v894, 2
      %v896 = vmax.f32 %v894, %v895
      %v897 = vrot.slane %v896, 1
      %v898 = vmax.f32 %v896, %v897
      %v899 = vsub.f32 %v898, %v892
      %vm900 = vcmp.eq.f32.partialorder %v899, 0.0
      %v901 = vsel %vm900, 1.0, %v899
      %v902 = vsub.f32 %v778, %v892
      %v903 = vmul.f32 %v902, 2.0
      %v904 = vrcp.pop %v901
      %v905 = vmul.f32 %v903, %v904
      %v906 = vsub.f32 %v905, 1.0
      %v907 = vsub.f32 %v906, %v871
      %v908 = vtanh.pop %v907
      %v909 = vld [vmem:[%s5 + $0x1] sm:$0x1]
      %911 = vset.pattern.permute.xlu0 1
      %912 = vperm.xlu0 %911, %v908
      %v913 = vpop.permute.xlu0 %912
      %v915 = vlaneseq
      %v916 = vshrl.u32 %v915, 7
      %v917 = vsub.s32 0, %v916
      %v918 = vrot.slane %v909, %v917
      %v919 = vmul.f32 %v913, %v918
      %v920 = vadd.f32 %v886, %v919
      %v921 = vrot.slane %v784, 4
      %v922 = vmin.f32 %v784, %v921
      %v923 = vrot.slane %v922, 2
      %v924 = vmin.f32 %v922, %v923
      %v925 = vrot.slane %v924, 1
      %v926 = vmin.f32 %v924, %v925
      %v927 = vrot.slane %v784, 4
      %v928 = vmax.f32 %v784, %v927
      %v929 = vrot.slane %v928, 2
      %v930 = vmax.f32 %v928, %v929
      %v931 = vrot.slane %v930, 1
      %v932 = vmax.f32 %v930, %v931
      %v933 = vsub.f32 %v932, %v926
      %vm934 = vcmp.eq.f32.partialorder %v933, 0.0
      %v935 = vsel %vm934, 1.0, %v933
      %v936 = vsub.f32 %v784, %v926
      %v937 = vmul.f32 %v936, 2.0
      %v938 = vrcp.pop %v935
      %v939 = vmul.f32 %v937, %v938
      %v940 = vsub.f32 %v939, 1.0
      %v941 = vsub.f32 %v940, %v871
      %v942 = vtanh.pop %v941
      %v943 = vld [vmem:[%s5 + $0x2] sm:$0x1]
      %945 = vset.pattern.permute.xlu0 2
      %946 = vperm.xlu0 %945, %v942
      %v947 = vpop.permute.xlu0 %946
      %v949 = vlaneseq
      %v950 = vshrl.u32 %v949, 7
      %v951 = vsub.s32 0, %v950
      %v952 = vrot.slane %v943, %v951
      %v953 = vmul.f32 %v947, %v952
      %v954 = vadd.f32 %v920, %v953
      %v955 = vrot.slane %v816, 4
      %v956 = vmin.f32 %v816, %v955
      %v957 = vrot.slane %v956, 2
      %v958 = vmin.f32 %v956, %v957
      %v959 = vrot.slane %v958, 1
      %v960 = vmin.f32 %v958, %v959
      %v961 = vrot.slane %v816, 4
      %v962 = vmax.f32 %v816, %v961
      %v963 = vrot.slane %v962, 2
      %v964 = vmax.f32 %v962, %v963
      %v965 = vrot.slane %v964, 1
      %v966 = vmax.f32 %v964, %v965
      %v967 = vsub.f32 %v966, %v960
      %vm968 = vcmp.eq.f32.partialorder %v967, 0.0
      %v969 = vsel %vm968, 1.0, %v967
      %v970 = vsub.f32 %v816, %v960
      %v971 = vmul.f32 %v970, 2.0
      %v972 = vrcp.pop %v969
      %v973 = vmul.f32 %v971, %v972
      %v974 = vsub.f32 %v973, 1.0
      %v975 = vsub.f32 %v974, %v871
      %v976 = vtanh.pop %v975
      %v977 = vld [vmem:[%s5 + $0x3] sm:$0x1]
      %979 = vset.pattern.permute.xlu0 3
      %980 = vperm.xlu0 %979, %v976
      %v981 = vpop.permute.xlu0 %980
      %v983 = vlaneseq
      %v984 = vshrl.u32 %v983, 7
      %v985 = vsub.s32 0, %v984
      %v986 = vrot.slane %v977, %v985
      %v987 = vmul.f32 %v981, %v986
      %v988 = vadd.f32 %v954, %v987
      %v989 = vrot.slane %v837, 4
      %v990 = vmin.f32 %v837, %v989
      %v991 = vrot.slane %v990, 2
      %v992 = vmin.f32 %v990, %v991
      %v993 = vrot.slane %v992, 1
      %v994 = vmin.f32 %v992, %v993
      %v995 = vrot.slane %v837, 4
      %v996 = vmax.f32 %v837, %v995
      %v997 = vrot.slane %v996, 2
      %v998 = vmax.f32 %v996, %v997
      %v999 = vrot.slane %v998, 1
      %v1000 = vmax.f32 %v998, %v999
      %v1001 = vsub.f32 %v1000, %v994
      %vm1002 = vcmp.eq.f32.partialorder %v1001, 0.0
      %v1003 = vsel %vm1002, 1.0, %v1001
      %v1004 = vsub.f32 %v837, %v994
      %v1005 = vmul.f32 %v1004, 2.0
      %v1006 = vrcp.pop %v1003
      %v1007 = vmul.f32 %v1005, %v1006
      %v1008 = vsub.f32 %v1007, 1.0
      %v1009 = vsub.f32 %v1008, %v871
      %v1010 = vtanh.pop %v1009
      %v1011 = vld [vmem:[%s5 + $0x4] sm:$0x1]
      %1013 = vset.pattern.permute.xlu0 4
      %1014 = vperm.xlu0 %1013, %v1010
      %v1015 = vpop.permute.xlu0 %1014
      %v1017 = vlaneseq
      %v1018 = vshrl.u32 %v1017, 7
      %v1019 = vsub.s32 0, %v1018
      %v1020 = vrot.slane %v1011, %v1019
      %v1021 = vmul.f32 %v1015, %v1020
      %v1022 = vadd.f32 %v988, %v1021
      %v1023 = vmax.f32 %v1022, 0.0
      %v1024 = vld [vmem:[#allocation2] sm:$0xff]
      %v1025 = vld [vmem:[#allocation2 + $0x8] sm:$0xff]
      %v1026 = vld [vmem:[#allocation2 + $0x10] sm:$0xff]
      %v1027 = vld [vmem:[#allocation2 + $0x18] sm:$0xff]
      %v1028 = vld [vmem:[#allocation2 + $0x20] sm:$0xff]
      %v1029 = vld [vmem:[#allocation2 + $0x28] sm:$0xff]
      %v1030 = vld [vmem:[#allocation2 + $0x30] sm:$0xff]
      %v1031 = vld [vmem:[#allocation2 + $0x38] sm:$0xff]
      %v1032 = vld [vmem:[#allocation2 + $0x40] sm:$0xff]
      %v1033 = vld [vmem:[#allocation2 + $0x48] sm:$0xff]
      %v1034 = vld [vmem:[#allocation2 + $0x50] sm:$0xff]
      %v1035 = vld [vmem:[#allocation2 + $0x58] sm:$0xff]
      %v1036 = vld [vmem:[#allocation2 + $0x60] sm:$0xff]
      %v1037 = vld [vmem:[#allocation2 + $0x68] sm:$0xff]
      %v1038 = vld [vmem:[#allocation2 + $0x70] sm:$0xff]
      %v1039 = vld [vmem:[#allocation2 + $0x78] sm:$0xff]
      %v1040 = vld [vmem:[%s8] sm:$0x1]
      %v1042 = vlaneseq
      %v1043 = vshrl.u32 %v1042, 7
      %v1044 = vsub.s32 0, %v1043
      %v1045 = vrot.slane %v1040, %v1044
      %1047 = vmatprep.subr.mxu0 0.0
      %1048 = vmatpush1.msra.mxu0 %v1024
      %1049 = vmatprep.subr.mxu0 0.0
      %1050 = vmatpush1.msra.mxu0 %v1025
      %1051 = vmatprep.subr.mxu0 0.0
      %1052 = vmatpush1.msra.mxu0 %v1026
      %1053 = vmatprep.subr.mxu0 0.0
      %1054 = vmatpush1.msra.mxu0 %v1027
      %1055 = vmatprep.subr.mxu0 0.0
      %1056 = vmatpush1.msra.mxu0 %v1028
      %1057 = vmatprep.subr.mxu0 0.0
      %1058 = vmatpush1.msra.mxu0 %v1029
      %1059 = vmatprep.subr.mxu0 0.0
      %1060 = vmatpush1.msra.mxu0 %v1030
      %1061 = vmatprep.subr.mxu0 0.0
      %1062 = vmatpush1.msra.mxu0 %v1031
      %1063 = vmatprep.subr.mxu0 0.0
      %1064 = vmatpush1.msra.mxu0 %v1032
      %1065 = vmatprep.subr.mxu0 0.0
      %1066 = vmatpush1.msra.mxu0 %v1033
      %1067 = vmatprep.subr.mxu0 0.0
      %1068 = vmatpush1.msra.mxu0 %v1034
      %1069 = vmatprep.subr.mxu0 0.0
      %1070 = vmatpush1.msra.mxu0 %v1035
      %1071 = vmatprep.subr.mxu0 0.0
      %1072 = vmatpush1.msra.mxu0 %v1036
      %1073 = vmatprep.subr.mxu0 0.0
      %1074 = vmatpush1.msra.mxu0 %v1037
      %1075 = vmatprep.subr.mxu0 0.0
      %1076 = vmatpush1.msra.mxu0 %v1038
      %1077 = vmatprep.subr.mxu0 0.0
      %1078 = vmatpush1.msra.mxu0 %v1039
      %1079 = vmatprep.subr.mxu0 0.0
      %1080 = vmatpush1.msra.mxu0 0.0
      %1081 = vmatprep.subr.mxu0 0.0
      %1082 = vmatpush1.msra.mxu0 0.0
      %1083 = vmatprep.subr.mxu0 0.0
      %1084 = vmatpush1.msra.mxu0 0.0
      %1085 = vmatprep.subr.mxu0 0.0
      %1086 = vmatpush1.msra.mxu0 0.0
      %1087 = vmatprep.subr.mxu0 0.0
      %1088 = vmatpush1.msra.mxu0 0.0
      %1089 = vmatprep.subr.mxu0 0.0
      %1090 = vmatpush1.msra.mxu0 0.0
      %1091 = vmatprep.subr.mxu0 0.0
      %1092 = vmatpush1.msra.mxu0 0.0
      %1093 = vmatprep.subr.mxu0 0.0
      %1094 = vmatpush1.msra.mxu0 0.0
      %1095 = vmatprep.subr.mxu0 0.0
      %1096 = vmatpush1.msra.mxu0 0.0
      %1097 = vmatprep.subr.mxu0 0.0
      %1098 = vmatpush1.msra.mxu0 0.0
      %1099 = vmatprep.subr.mxu0 0.0
      %1100 = vmatpush1.msra.mxu0 0.0
      %1101 = vmatprep.subr.mxu0 0.0
      %1102 = vmatpush1.msra.mxu0 0.0
      %1103 = vmatprep.subr.mxu0 0.0
      %1104 = vmatpush1.msra.mxu0 0.0
      %1105 = vmatprep.subr.mxu0 0.0
      %1106 = vmatpush1.msra.mxu0 0.0
      %1107 = vmatprep.subr.mxu0 0.0
      %1108 = vmatpush1.msra.mxu0 0.0
      %1109 = vmatprep.subr.mxu0 0.0
      %1110 = vmatpush1.msra.mxu0 0.0
      %1111 = vmatprep.mubr.f32.mxu0 0.0
      %1112 = vmatmul.mubr.f32.gmra.mrb[0].mxu0 %v1023
      %v1113 = vpop.f32.mrb[0].mxu0
      %v1114 = vadd.f32 %v1045, %v1113
      %v1115 = vpop.f32.mrb[0].mxu0
      %1116 = vdwg.mxu0
      %1117 = vst [vmem:[%s10] sm:$0xff] %v1114
    $region49: #{ensemble_forward.1} parent=1 // pred_fallthru
      _
    // Predicated region
    $region50: #{ensemble_forward.1} parent=1 // pred_check
      _
    $region51: #{ensemble_forward.1} parent=1 // pred_check_branch
      %1119 = sbr.rel (0) target = $region53
    $region52: #{ensemble_forward.1} parent=1 // pred_region
      %s1121 = ssub.s32 128, 128
      %1122 = vsyncadd [#allocation4], %s1121
      %s1124 = sshll.u32 [#allocation5], 4
      %s1125 = int_to_ptr.vmem [resolvable:$true] %s1124
      %1127 = dma.vmem_to_hbm [thread:$0]  %s1125, 128, %s9, [#allocation4]
    $region53: #{ensemble_forward.1} parent=1 // pred_fallthru
      _
    // Predicated region
    $region54: #{ensemble_forward.1} parent=1 // pred_check
      _
    $region55: #{ensemble_forward.1} parent=1 // pred_check_branch
      %1129 = sbr.rel (0) target = $region57
    $region56: #{ensemble_forward.1} parent=1 // pred_region
      _
    $region57: #{ensemble_forward.1} parent=1 // pred_fallthru
      _
    // Predicated region
    $region58: #{ensemble_forward.1} parent=1 // pred_check
      _
    $region59: #{ensemble_forward.1} parent=1 // pred_check_branch
      %1131 = sbr.rel (0) target = $region61
    $region60: #{ensemble_forward.1} parent=1 // pred_region
      %1132 = dma.done [#allocation4], 128
    $region61: #{ensemble_forward.1} parent=1 // pred_fallthru
      _
    // Predicated region
    $region62: #{ensemble_forward.1} parent=1 // pred_check
      _
    $region63: #{ensemble_forward.1} parent=1 // pred_check_branch
      %1134 = sbr.rel (0) target = $region65
    $region64: #{ensemble_forward.1} parent=1 // pred_region
      _
    $region65: #{ensemble_forward.1} parent=1 // pred_fallthru
      _
    %1135 = vsyncpa [#allocation3], 1
    %1136 = vsyncpa [#allocation4], 1

</llo_original>
